<compile_context>
chip_gen: v7x
topology: tpu7x:2x2x1
jax: 0.10.0
libtpu: 0.0.40
codegen_flags: <defaults>
</compile_context>

<pallas_src>
import functools
import math

import jax
import jax.numpy as jnp
from jax.experimental import pallas as pl
from jax.experimental.pallas import tpu as pltpu


# -----------------------------------------------------------------------------
# Fused multi-head attention kernel (one grid step == one batch element)
# -----------------------------------------------------------------------------
def _mha_kernel(xq_ref, xk_ref, xv_ref, m_ref,
                wq_ref, bq_ref, wk_ref, bk_ref,
                wv_ref, bv_ref, wo_ref, bo_ref,
                o_ref, *, heads):
    S, D = xq_ref.shape                      # squeezed blocks -> 2-D refs
    dk = D // heads
    scale = 1.0 / math.sqrt(dk)

    xq = xq_ref[...].astype(jnp.float32)     # (S, D)
    xk = xk_ref[...].astype(jnp.float32)
    xv = xv_ref[...].astype(jnp.float32)

    # Q/K/V projections fused into this kernel (no HBM writeback of Q/K/V).
    q = jnp.dot(xq, wq_ref[...], preferred_element_type=jnp.float32) + bq_ref[...]
    k = jnp.dot(xk, wk_ref[...], preferred_element_type=jnp.float32) + bk_ref[...]
    v = jnp.dot(xv, wv_ref[...], preferred_element_type=jnp.float32) + bv_ref[...]

    keep = m_ref[...]                        # (1, S): 1 = keep, 0 = mask out
    neg = jnp.float32(-1e9)

    # Heads packed along the lane axis; static slices per head, all inside one
    # kernel invocation (no per-head grid steps, no transposes).
    head_outs = []
    for h in range(heads):
        qh = q[:, h * dk:(h + 1) * dk]       # (S, dk)
        kh = k[:, h * dk:(h + 1) * dk]
        vh = v[:, h * dk:(h + 1) * dk]

        s = jnp.dot(qh, kh.T, preferred_element_type=jnp.float32) * scale
        s = jnp.where(keep == 0.0, neg, s)   # masked_fill(mask == 0, -1e9)

        s_max = jnp.max(s, axis=-1, keepdims=True)
        p = jnp.exp(s - s_max)
        p = p * pl.reciprocal(jnp.sum(p, axis=-1, keepdims=True), approx=True)
        # TODO(synk): nn.Dropout(0.1) on the attention probs has no effect at
        # eval time; implemented as identity.

        head_outs.append(jnp.dot(p, vh, preferred_element_type=jnp.float32))

    ctx = jnp.concatenate(head_outs, axis=-1)               # (S, D), lane-dense

    y = jnp.dot(ctx, wo_ref[...], preferred_element_type=jnp.float32) + bo_ref[...]
    o_ref[...] = y.astype(o_ref.dtype)                      # single dense store


# -----------------------------------------------------------------------------
# Wrapper
# -----------------------------------------------------------------------------
def multi_header_attention(query, key, value, mask, params):
    """query/key/value: (B, S, D) float; mask: (B, 1, S) (1 keep, 0 mask) or None."""
    B, S, D = query.shape
    H = params["heads"]
    assert D % H == 0, "embed_dim is undivisible"

    if mask is None:
        mask = jnp.ones((B, 1, S), jnp.float32)
    mask = mask.reshape(B, 1, S).astype(jnp.float32)

    def row_spec():
        return pl.BlockSpec((None, S, D), lambda b: (b, 0, 0))

    def const2d(shape):
        return pl.BlockSpec(shape, lambda b: (0, 0))

    kernel = functools.partial(_mha_kernel, heads=H)
    return pl.pallas_call(
        kernel,
        out_shape=jax.ShapeDtypeStruct((B, S, D), query.dtype),
        grid=(B,),
        in_specs=[
            row_spec(), row_spec(), row_spec(),                   # xq, xk, xv
            pl.BlockSpec((None, 1, S), lambda b: (b, 0, 0)),      # mask row
            const2d((D, D)), const2d((1, D)),                     # wq, bq
            const2d((D, D)), const2d((1, D)),                     # wk, bk
            const2d((D, D)), const2d((1, D)),                     # wv, bv
            const2d((D, D)), const2d((1, D)),                     # wo, bo
        ],
        out_specs=pl.BlockSpec((None, S, D), lambda b: (b, 0, 0)),
        compiler_params=pltpu.CompilerParams(
            dimension_semantics=("parallel",)),
    )(query, key, value, mask,
      params["wq"], params["bq"].reshape(1, D),
      params["wk"], params["bk"].reshape(1, D),
      params["wv"], params["bv"].reshape(1, D),
      params["wo"], params["bo"].reshape(1, D))


# -----------------------------------------------------------------------------
# Pure-JAX reference (mirrors the PyTorch module, eval mode)
# -----------------------------------------------------------------------------
def _mha_ref(query, key, value, mask, params):
    B, S, D = query.shape
    H = params["heads"]
    dk = D // H

    q = (query @ params["wq"] + params["bq"]).reshape(B, S, H, dk).transpose(0, 2, 1, 3)
    k = (key   @ params["wk"] + params["bk"]).reshape(B, S, H, dk).transpose(0, 2, 1, 3)
    v = (value @ params["wv"] + params["bv"]).reshape(B, S, H, dk).transpose(0, 2, 1, 3)

    s = jnp.einsum("bhqd,bhkd->bhqk", q, k) / math.sqrt(dk)
    m = mask.reshape(B, 1, 1, S)
    s = jnp.where(m == 0.0, -1e9, s)
    p = jax.nn.softmax(s, axis=-1)
    o = jnp.einsum("bhqk,bhkd->bhqd", p, v)
    o = o.transpose(0, 2, 1, 3).reshape(B, S, D)
    return o @ params["wo"] + params["bo"]


# -----------------------------------------------------------------------------
# Main
# -----------------------------------------------------------------------------
if __name__ == "__main__":
    B, S, D, H = 2, 8, 32, 4     # batch, sequence, embed_dim, heads

    key0 = jax.random.PRNGKey(0)
    ks = jax.random.split(key0, 16)

    def init(k, shape, scale=0.02):
        return (scale * jax.random.normal(k, shape)).astype(jnp.float32)

    # Weights stored as (in, out) so kernels compute x @ W + b
    # (equivalent to PyTorch's x @ W.T + b with W of shape (out, in)).
    params = dict(
        heads=H,
        wq=init(ks[0], (D, D)), bq=init(ks[1], (D,)),
        wk=init(ks[2], (D, D)), bk=init(ks[3], (D,)),
        wv=init(ks[4], (D, D)), bv=init(ks[5], (D,)),
        wo=init(ks[6], (D, D)), bo=init(ks[7], (D,)),
    )

    query = jax.random.normal(ks[10], (B, S, D), jnp.float32)
    key_t = jax.random.normal(ks[11], (B, S, D), jnp.float32)
    value = jax.random.normal(ks[12], (B, S, D), jnp.float32)

    # Key-padding mask: keep all positions in batch 0, mask last 3 in batch 1.
    valid_len = jnp.array([S, S - 3])
    mask = (jnp.arange(S)[None, None, :] < valid_len[:, None, None]).astype(jnp.float32)

    out = multi_header_attention(query, key_t, value, mask, params)
    jax.block_until_ready(out)
    assert out.shape == (B, S, D)

    ref = _mha_ref(query, key_t, value, mask, params)
    assert jnp.allclose(out, ref, atol=1e-3, rtol=1e-2), (
        float(jnp.max(jnp.abs(out - ref))))

    print("KERNEL_OK")
</pallas_src>

<mosaic_0001>
module attributes {stable_mosaic.version = 11 : i64} {
  func.func @_mha_kernel(%arg0: i32, %arg1: memref<1x8x32xf32, #tpu.memory_space<vmem>>, %arg2: memref<1x8x32xf32, #tpu.memory_space<vmem>>, %arg3: memref<1x8x32xf32, #tpu.memory_space<vmem>>, %arg4: memref<1x1x8xf32, #tpu.memory_space<vmem>>, %arg5: memref<32x32xf32, #tpu.memory_space<vmem>>, %arg6: memref<1x32xf32, #tpu.memory_space<vmem>>, %arg7: memref<32x32xf32, #tpu.memory_space<vmem>>, %arg8: memref<1x32xf32, #tpu.memory_space<vmem>>, %arg9: memref<32x32xf32, #tpu.memory_space<vmem>>, %arg10: memref<1x32xf32, #tpu.memory_space<vmem>>, %arg11: memref<32x32xf32, #tpu.memory_space<vmem>>, %arg12: memref<1x32xf32, #tpu.memory_space<vmem>>, %arg13: memref<1x8x32xf32, #tpu.memory_space<vmem>>) attributes {dimension_semantics = [#tpu.dimension_semantics<parallel>], iteration_bounds = array<i64: 2>, scalar_prefetch = 0 : i64, scratch_operands = 0 : i64, tpu.core_type = #tpu.core_type<tc>, window_params = [{transform_indices = @transform_0, window_bounds = array<i64: 1, 8, 32>}, {transform_indices = @transform_1, window_bounds = array<i64: 1, 8, 32>}, {transform_indices = @transform_2, window_bounds = array<i64: 1, 8, 32>}, {transform_indices = @transform_3, window_bounds = array<i64: 1, 1, 8>}, {pipeline_mode = #tpu.pipeline_mode<synchronous>, transform_indices = @transform_4, window_bounds = array<i64: 32, 32>}, {pipeline_mode = #tpu.pipeline_mode<synchronous>, transform_indices = @transform_5, window_bounds = array<i64: 1, 32>}, {pipeline_mode = #tpu.pipeline_mode<synchronous>, transform_indices = @transform_6, window_bounds = array<i64: 32, 32>}, {pipeline_mode = #tpu.pipeline_mode<synchronous>, transform_indices = @transform_7, window_bounds = array<i64: 1, 32>}, {pipeline_mode = #tpu.pipeline_mode<synchronous>, transform_indices = @transform_8, window_bounds = array<i64: 32, 32>}, {pipeline_mode = #tpu.pipeline_mode<synchronous>, transform_indices = @transform_9, window_bounds = array<i64: 1, 32>}, {pipeline_mode = #tpu.pipeline_mode<synchronous>, transform_indices = @transform_10, window_bounds = array<i64: 32, 32>}, {pipeline_mode = #tpu.pipeline_mode<synchronous>, transform_indices = @transform_11, window_bounds = array<i64: 1, 32>}, {transform_indices = @transform_12, window_bounds = array<i64: 1, 8, 32>}]} {
    %c0 = arith.constant 0 : index
    %c0_0 = arith.constant 0 : index
    %c0_1 = arith.constant 0 : index
    %0 = vector.load %arg1[%c0, %c0_0, %c0_1] : memref<1x8x32xf32, #tpu.memory_space<vmem>>, vector<1x8x32xf32>
    %1 = vector.shape_cast %0 : vector<1x8x32xf32> to vector<8x32xf32>
    %c0_2 = arith.constant 0 : index
    %c0_3 = arith.constant 0 : index
    %c0_4 = arith.constant 0 : index
    %2 = vector.load %arg2[%c0_2, %c0_3, %c0_4] : memref<1x8x32xf32, #tpu.memory_space<vmem>>, vector<1x8x32xf32>
    %3 = vector.shape_cast %2 : vector<1x8x32xf32> to vector<8x32xf32>
    %c0_5 = arith.constant 0 : index
    %c0_6 = arith.constant 0 : index
    %c0_7 = arith.constant 0 : index
    %4 = vector.load %arg3[%c0_5, %c0_6, %c0_7] : memref<1x8x32xf32, #tpu.memory_space<vmem>>, vector<1x8x32xf32>
    %5 = vector.shape_cast %4 : vector<1x8x32xf32> to vector<8x32xf32>
    %c0_8 = arith.constant 0 : index
    %c0_9 = arith.constant 0 : index
    %6 = vector.load %arg5[%c0_8, %c0_9] : memref<32x32xf32, #tpu.memory_space<vmem>>, vector<32x32xf32>
    %cst = arith.constant dense<0.000000e+00> : vector<8x32xf32>
    %7 = tpu.matmul %1, %6, %cst {dimension_numbers = #tpu.dot_dimension_numbers<[1], [0], [0], [1], [0, 0, 1, 1], [], []>} : vector<8x32xf32>, vector<32x32xf32>, vector<8x32xf32> -> vector<8x32xf32>
    %c0_10 = arith.constant 0 : index
    %c0_11 = arith.constant 0 : index
    %8 = vector.load %arg6[%c0_10, %c0_11] : memref<1x32xf32, #tpu.memory_space<vmem>>, vector<1x32xf32>
    %9 = vector.broadcast %8 : vector<1x32xf32> to vector<8x32xf32>
    %10 = arith.addf %7, %9 : vector<8x32xf32>
    %c0_12 = arith.constant 0 : index
    %c0_13 = arith.constant 0 : index
    %11 = vector.load %arg7[%c0_12, %c0_13] : memref<32x32xf32, #tpu.memory_space<vmem>>, vector<32x32xf32>
    %cst_14 = arith.constant dense<0.000000e+00> : vector<8x32xf32>
    %12 = tpu.matmul %3, %11, %cst_14 {dimension_numbers = #tpu.dot_dimension_numbers<[1], [0], [0], [1], [0, 0, 1, 1], [], []>} : vector<8x32xf32>, vector<32x32xf32>, vector<8x32xf32> -> vector<8x32xf32>
    %c0_15 = arith.constant 0 : index
    %c0_16 = arith.constant 0 : index
    %13 = vector.load %arg8[%c0_15, %c0_16] : memref<1x32xf32, #tpu.memory_space<vmem>>, vector<1x32xf32>
    %14 = vector.broadcast %13 : vector<1x32xf32> to vector<8x32xf32>
    %15 = arith.addf %12, %14 : vector<8x32xf32>
    %c0_17 = arith.constant 0 : index
    %c0_18 = arith.constant 0 : index
    %16 = vector.load %arg9[%c0_17, %c0_18] : memref<32x32xf32, #tpu.memory_space<vmem>>, vector<32x32xf32>
    %cst_19 = arith.constant dense<0.000000e+00> : vector<8x32xf32>
    %17 = tpu.matmul %5, %16, %cst_19 {dimension_numbers = #tpu.dot_dimension_numbers<[1], [0], [0], [1], [0, 0, 1, 1], [], []>} : vector<8x32xf32>, vector<32x32xf32>, vector<8x32xf32> -> vector<8x32xf32>
    %c0_20 = arith.constant 0 : index
    %c0_21 = arith.constant 0 : index
    %18 = vector.load %arg10[%c0_20, %c0_21] : memref<1x32xf32, #tpu.memory_space<vmem>>, vector<1x32xf32>
    %19 = vector.broadcast %18 : vector<1x32xf32> to vector<8x32xf32>
    %20 = arith.addf %17, %19 : vector<8x32xf32>
    %c0_22 = arith.constant 0 : index
    %c0_23 = arith.constant 0 : index
    %c0_24 = arith.constant 0 : index
    %21 = vector.load %arg4[%c0_22, %c0_23, %c0_24] : memref<1x1x8xf32, #tpu.memory_space<vmem>>, vector<1x1x8xf32>
    %22 = vector.shape_cast %21 : vector<1x1x8xf32> to vector<1x8xf32>
    %23 = vector.extract_strided_slice %10 {offsets = [0, 0], sizes = [8, 8], strides = [1, 1]} : vector<8x32xf32> to vector<8x8xf32>
    %24 = vector.extract_strided_slice %15 {offsets = [0, 0], sizes = [8, 8], strides = [1, 1]} : vector<8x32xf32> to vector<8x8xf32>
    %25 = vector.extract_strided_slice %20 {offsets = [0, 0], sizes = [8, 8], strides = [1, 1]} : vector<8x32xf32> to vector<8x8xf32>
    %26 = tpu.transpose %24, [1, 0] : vector<8x8xf32> -> vector<8x8xf32>
    %cst_25 = arith.constant dense<0.000000e+00> : vector<8x8xf32>
    %27 = tpu.matmul %23, %26, %cst_25 {dimension_numbers = #tpu.dot_dimension_numbers<[1], [0], [0], [1], [0, 0, 1, 1], [], []>} : vector<8x8xf32>, vector<8x8xf32>, vector<8x8xf32> -> vector<8x8xf32>
    %cst_26 = arith.constant 0.353553385 : f32
    %28 = vector.broadcast %cst_26 : f32 to vector<8x8xf32>
    %29 = arith.mulf %27, %28 : vector<8x8xf32>
    %cst_27 = arith.constant 0.000000e+00 : f32
    %30 = vector.broadcast %cst_27 : f32 to vector<1x8xf32>
    %31 = arith.cmpf oeq, %22, %30 : vector<1x8xf32>
    %cst_28 = arith.constant -1.000000e+09 : f32
    %32 = vector.shape_cast %31 : vector<1x8xi1> to vector<1x8xi1>
    %33 = vector.broadcast %32 : vector<1x8xi1> to vector<8x8xi1>
    %34 = vector.broadcast %cst_28 : f32 to vector<8x8xf32>
    %35 = arith.select %33, %34, %29 : vector<8x8xi1>, vector<8x8xf32>
    %cst_29 = arith.constant dense<0xFF800000> : vector<8xf32>
    %36 = vector.multi_reduction <maximumf>, %35, %cst_29 [1] : vector<8x8xf32> to vector<8xf32>
    %37 = vector.shape_cast %36 : vector<8xf32> to vector<8x1xf32>
    %38 = vector.broadcast %37 : vector<8x1xf32> to vector<8x8xf32>
    %39 = arith.subf %35, %38 : vector<8x8xf32>
    %40 = math.exp %39 : vector<8x8xf32>
    %cst_30 = arith.constant dense<0.000000e+00> : vector<8xf32>
    %41 = vector.multi_reduction <add>, %40, %cst_30 [1] : vector<8x8xf32> to vector<8xf32>
    %42 = vector.shape_cast %41 : vector<8xf32> to vector<8x1xf32>
    %43 = tpu.reciprocal %42 {approx = true} : vector<8x1xf32> -> vector<8x1xf32>
    %44 = vector.broadcast %43 : vector<8x1xf32> to vector<8x8xf32>
    %45 = arith.mulf %40, %44 : vector<8x8xf32>
    %cst_31 = arith.constant dense<0.000000e+00> : vector<8x8xf32>
    %46 = tpu.matmul %45, %25, %cst_31 {dimension_numbers = #tpu.dot_dimension_numbers<[1], [0], [0], [1], [0, 0, 1, 1], [], []>} : vector<8x8xf32>, vector<8x8xf32>, vector<8x8xf32> -> vector<8x8xf32>
    %47 = vector.extract_strided_slice %10 {offsets = [0, 8], sizes = [8, 8], strides = [1, 1]} : vector<8x32xf32> to vector<8x8xf32>
    %48 = vector.extract_strided_slice %15 {offsets = [0, 8], sizes = [8, 8], strides = [1, 1]} : vector<8x32xf32> to vector<8x8xf32>
    %49 = vector.extract_strided_slice %20 {offsets = [0, 8], sizes = [8, 8], strides = [1, 1]} : vector<8x32xf32> to vector<8x8xf32>
    %50 = tpu.transpose %48, [1, 0] : vector<8x8xf32> -> vector<8x8xf32>
    %cst_32 = arith.constant dense<0.000000e+00> : vector<8x8xf32>
    %51 = tpu.matmul %47, %50, %cst_32 {dimension_numbers = #tpu.dot_dimension_numbers<[1], [0], [0], [1], [0, 0, 1, 1], [], []>} : vector<8x8xf32>, vector<8x8xf32>, vector<8x8xf32> -> vector<8x8xf32>
    %cst_33 = arith.constant 0.353553385 : f32
    %52 = vector.broadcast %cst_33 : f32 to vector<8x8xf32>
    %53 = arith.mulf %51, %52 : vector<8x8xf32>
    %cst_34 = arith.constant 0.000000e+00 : f32
    %54 = vector.broadcast %cst_34 : f32 to vector<1x8xf32>
    %55 = arith.cmpf oeq, %22, %54 : vector<1x8xf32>
    %cst_35 = arith.constant -1.000000e+09 : f32
    %56 = vector.shape_cast %55 : vector<1x8xi1> to vector<1x8xi1>
    %57 = vector.broadcast %56 : vector<1x8xi1> to vector<8x8xi1>
    %58 = vector.broadcast %cst_35 : f32 to vector<8x8xf32>
    %59 = arith.select %57, %58, %53 : vector<8x8xi1>, vector<8x8xf32>
    %cst_36 = arith.constant dense<0xFF800000> : vector<8xf32>
    %60 = vector.multi_reduction <maximumf>, %59, %cst_36 [1] : vector<8x8xf32> to vector<8xf32>
    %61 = vector.shape_cast %60 : vector<8xf32> to vector<8x1xf32>
    %62 = vector.broadcast %61 : vector<8x1xf32> to vector<8x8xf32>
    %63 = arith.subf %59, %62 : vector<8x8xf32>
    %64 = math.exp %63 : vector<8x8xf32>
    %cst_37 = arith.constant dense<0.000000e+00> : vector<8xf32>
    %65 = vector.multi_reduction <add>, %64, %cst_37 [1] : vector<8x8xf32> to vector<8xf32>
    %66 = vector.shape_cast %65 : vector<8xf32> to vector<8x1xf32>
    %67 = tpu.reciprocal %66 {approx = true} : vector<8x1xf32> -> vector<8x1xf32>
    %68 = vector.broadcast %67 : vector<8x1xf32> to vector<8x8xf32>
    %69 = arith.mulf %64, %68 : vector<8x8xf32>
    %cst_38 = arith.constant dense<0.000000e+00> : vector<8x8xf32>
    %70 = tpu.matmul %69, %49, %cst_38 {dimension_numbers = #tpu.dot_dimension_numbers<[1], [0], [0], [1], [0, 0, 1, 1], [], []>} : vector<8x8xf32>, vector<8x8xf32>, vector<8x8xf32> -> vector<8x8xf32>
    %71 = vector.extract_strided_slice %10 {offsets = [0, 16], sizes = [8, 8], strides = [1, 1]} : vector<8x32xf32> to vector<8x8xf32>
    %72 = vector.extract_strided_slice %15 {offsets = [0, 16], sizes = [8, 8], strides = [1, 1]} : vector<8x32xf32> to vector<8x8xf32>
    %73 = vector.extract_strided_slice %20 {offsets = [0, 16], sizes = [8, 8], strides = [1, 1]} : vector<8x32xf32> to vector<8x8xf32>
    %74 = tpu.transpose %72, [1, 0] : vector<8x8xf32> -> vector<8x8xf32>
    %cst_39 = arith.constant dense<0.000000e+00> : vector<8x8xf32>
    %75 = tpu.matmul %71, %74, %cst_39 {dimension_numbers = #tpu.dot_dimension_numbers<[1], [0], [0], [1], [0, 0, 1, 1], [], []>} : vector<8x8xf32>, vector<8x8xf32>, vector<8x8xf32> -> vector<8x8xf32>
    %cst_40 = arith.constant 0.353553385 : f32
    %76 = vector.broadcast %cst_40 : f32 to vector<8x8xf32>
    %77 = arith.mulf %75, %76 : vector<8x8xf32>
    %cst_41 = arith.constant 0.000000e+00 : f32
    %78 = vector.broadcast %cst_41 : f32 to vector<1x8xf32>
    %79 = arith.cmpf oeq, %22, %78 : vector<1x8xf32>
    %cst_42 = arith.constant -1.000000e+09 : f32
    %80 = vector.shape_cast %79 : vector<1x8xi1> to vector<1x8xi1>
    %81 = vector.broadcast %80 : vector<1x8xi1> to vector<8x8xi1>
    %82 = vector.broadcast %cst_42 : f32 to vector<8x8xf32>
    %83 = arith.select %81, %82, %77 : vector<8x8xi1>, vector<8x8xf32>
    %cst_43 = arith.constant dense<0xFF800000> : vector<8xf32>
    %84 = vector.multi_reduction <maximumf>, %83, %cst_43 [1] : vector<8x8xf32> to vector<8xf32>
    %85 = vector.shape_cast %84 : vector<8xf32> to vector<8x1xf32>
    %86 = vector.broadcast %85 : vector<8x1xf32> to vector<8x8xf32>
    %87 = arith.subf %83, %86 : vector<8x8xf32>
    %88 = math.exp %87 : vector<8x8xf32>
    %cst_44 = arith.constant dense<0.000000e+00> : vector<8xf32>
    %89 = vector.multi_reduction <add>, %88, %cst_44 [1] : vector<8x8xf32> to vector<8xf32>
    %90 = vector.shape_cast %89 : vector<8xf32> to vector<8x1xf32>
    %91 = tpu.reciprocal %90 {approx = true} : vector<8x1xf32> -> vector<8x1xf32>
    %92 = vector.broadcast %91 : vector<8x1xf32> to vector<8x8xf32>
    %93 = arith.mulf %88, %92 : vector<8x8xf32>
    %cst_45 = arith.constant dense<0.000000e+00> : vector<8x8xf32>
    %94 = tpu.matmul %93, %73, %cst_45 {dimension_numbers = #tpu.dot_dimension_numbers<[1], [0], [0], [1], [0, 0, 1, 1], [], []>} : vector<8x8xf32>, vector<8x8xf32>, vector<8x8xf32> -> vector<8x8xf32>
    %95 = vector.extract_strided_slice %10 {offsets = [0, 24], sizes = [8, 8], strides = [1, 1]} : vector<8x32xf32> to vector<8x8xf32>
    %96 = vector.extract_strided_slice %15 {offsets = [0, 24], sizes = [8, 8], strides = [1, 1]} : vector<8x32xf32> to vector<8x8xf32>
    %97 = vector.extract_strided_slice %20 {offsets = [0, 24], sizes = [8, 8], strides = [1, 1]} : vector<8x32xf32> to vector<8x8xf32>
    %98 = tpu.transpose %96, [1, 0] : vector<8x8xf32> -> vector<8x8xf32>
    %cst_46 = arith.constant dense<0.000000e+00> : vector<8x8xf32>
    %99 = tpu.matmul %95, %98, %cst_46 {dimension_numbers = #tpu.dot_dimension_numbers<[1], [0], [0], [1], [0, 0, 1, 1], [], []>} : vector<8x8xf32>, vector<8x8xf32>, vector<8x8xf32> -> vector<8x8xf32>
    %cst_47 = arith.constant 0.353553385 : f32
    %100 = vector.broadcast %cst_47 : f32 to vector<8x8xf32>
    %101 = arith.mulf %99, %100 : vector<8x8xf32>
    %cst_48 = arith.constant 0.000000e+00 : f32
    %102 = vector.broadcast %cst_48 : f32 to vector<1x8xf32>
    %103 = arith.cmpf oeq, %22, %102 : vector<1x8xf32>
    %cst_49 = arith.constant -1.000000e+09 : f32
    %104 = vector.shape_cast %103 : vector<1x8xi1> to vector<1x8xi1>
    %105 = vector.broadcast %104 : vector<1x8xi1> to vector<8x8xi1>
    %106 = vector.broadcast %cst_49 : f32 to vector<8x8xf32>
    %107 = arith.select %105, %106, %101 : vector<8x8xi1>, vector<8x8xf32>
    %cst_50 = arith.constant dense<0xFF800000> : vector<8xf32>
    %108 = vector.multi_reduction <maximumf>, %107, %cst_50 [1] : vector<8x8xf32> to vector<8xf32>
    %109 = vector.shape_cast %108 : vector<8xf32> to vector<8x1xf32>
    %110 = vector.broadcast %109 : vector<8x1xf32> to vector<8x8xf32>
    %111 = arith.subf %107, %110 : vector<8x8xf32>
    %112 = math.exp %111 : vector<8x8xf32>
    %cst_51 = arith.constant dense<0.000000e+00> : vector<8xf32>
    %113 = vector.multi_reduction <add>, %112, %cst_51 [1] : vector<8x8xf32> to vector<8xf32>
    %114 = vector.shape_cast %113 : vector<8xf32> to vector<8x1xf32>
    %115 = tpu.reciprocal %114 {approx = true} : vector<8x1xf32> -> vector<8x1xf32>
    %116 = vector.broadcast %115 : vector<8x1xf32> to vector<8x8xf32>
    %117 = arith.mulf %112, %116 : vector<8x8xf32>
    %cst_52 = arith.constant dense<0.000000e+00> : vector<8x8xf32>
    %118 = tpu.matmul %117, %97, %cst_52 {dimension_numbers = #tpu.dot_dimension_numbers<[1], [0], [0], [1], [0, 0, 1, 1], [], []>} : vector<8x8xf32>, vector<8x8xf32>, vector<8x8xf32> -> vector<8x8xf32>
    %119 = tpu.concatenate %46, %70, %94, %118 in 1 : vector<8x8xf32>, vector<8x8xf32>, vector<8x8xf32>, vector<8x8xf32> -> vector<8x32xf32>
    %c0_53 = arith.constant 0 : index
    %c0_54 = arith.constant 0 : index
    %120 = vector.load %arg11[%c0_53, %c0_54] : memref<32x32xf32, #tpu.memory_space<vmem>>, vector<32x32xf32>
    %cst_55 = arith.constant dense<0.000000e+00> : vector<8x32xf32>
    %121 = tpu.matmul %119, %120, %cst_55 {dimension_numbers = #tpu.dot_dimension_numbers<[1], [0], [0], [1], [0, 0, 1, 1], [], []>} : vector<8x32xf32>, vector<32x32xf32>, vector<8x32xf32> -> vector<8x32xf32>
    %c0_56 = arith.constant 0 : index
    %c0_57 = arith.constant 0 : index
    %122 = vector.load %arg12[%c0_56, %c0_57] : memref<1x32xf32, #tpu.memory_space<vmem>>, vector<1x32xf32>
    %123 = vector.broadcast %122 : vector<1x32xf32> to vector<8x32xf32>
    %124 = arith.addf %121, %123 : vector<8x32xf32>
    %c0_58 = arith.constant 0 : index
    %c0_59 = arith.constant 0 : index
    %c0_60 = arith.constant 0 : index
    %125 = vector.load %arg13[%c0_58, %c0_59, %c0_60] : memref<1x8x32xf32, #tpu.memory_space<vmem>>, vector<1x8x32xf32>
    %126 = vector.shape_cast %125 : vector<1x8x32xf32> to vector<8x32xf32>
    %127 = vector.shape_cast %124 : vector<8x32xf32> to vector<1x8x32xf32>
    tpu.vector_store %arg13[%c0_58, %c0_59, %c0_60], %127 {strides = array<i32>} : memref<1x8x32xf32, #tpu.memory_space<vmem>>, vector<1x8x32xf32>,
    return
  }
  func.func @transform_0(%arg0: i32) -> (i32, i32, i32) {
    %c0_i32 = arith.constant 0 : i32
    %c0_i32_0 = arith.constant 0 : i32
    %c0_i32_1 = arith.constant 0 : i32
    return %arg0, %c0_i32, %c0_i32_0 : i32, i32, i32
  }
  func.func @transform_1(%arg0: i32) -> (i32, i32, i32) {
    %c0_i32 = arith.constant 0 : i32
    %c0_i32_0 = arith.constant 0 : i32
    %c0_i32_1 = arith.constant 0 : i32
    return %arg0, %c0_i32, %c0_i32_0 : i32, i32, i32
  }
  func.func @transform_2(%arg0: i32) -> (i32, i32, i32) {
    %c0_i32 = arith.constant 0 : i32
    %c0_i32_0 = arith.constant 0 : i32
    %c0_i32_1 = arith.constant 0 : i32
    return %arg0, %c0_i32, %c0_i32_0 : i32, i32, i32
  }
  func.func @transform_3(%arg0: i32) -> (i32, i32, i32) {
    %c0_i32 = arith.constant 0 : i32
    %c0_i32_0 = arith.constant 0 : i32
    %c0_i32_1 = arith.constant 0 : i32
    return %arg0, %c0_i32, %c0_i32_0 : i32, i32, i32
  }
  func.func @transform_4(%arg0: i32) -> (i32, i32) {
    %c0_i32 = arith.constant 0 : i32
    %c0_i32_0 = arith.constant 0 : i32
    %c0_i32_1 = arith.constant 0 : i32
    return %c0_i32, %c0_i32_0 : i32, i32
  }
  func.func @transform_5(%arg0: i32) -> (i32, i32) {
    %c0_i32 = arith.constant 0 : i32
    %c0_i32_0 = arith.constant 0 : i32
    %c0_i32_1 = arith.constant 0 : i32
    return %c0_i32, %c0_i32_0 : i32, i32
  }
  func.func @transform_6(%arg0: i32) -> (i32, i32) {
    %c0_i32 = arith.constant 0 : i32
    %c0_i32_0 = arith.constant 0 : i32
    %c0_i32_1 = arith.constant 0 : i32
    return %c0_i32, %c0_i32_0 : i32, i32
  }
  func.func @transform_7(%arg0: i32) -> (i32, i32) {
    %c0_i32 = arith.constant 0 : i32
    %c0_i32_0 = arith.constant 0 : i32
    %c0_i32_1 = arith.constant 0 : i32
    return %c0_i32, %c0_i32_0 : i32, i32
  }
  func.func @transform_8(%arg0: i32) -> (i32, i32) {
    %c0_i32 = arith.constant 0 : i32
    %c0_i32_0 = arith.constant 0 : i32
    %c0_i32_1 = arith.constant 0 : i32
    return %c0_i32, %c0_i32_0 : i32, i32
  }
  func.func @transform_9(%arg0: i32) -> (i32, i32) {
    %c0_i32 = arith.constant 0 : i32
    %c0_i32_0 = arith.constant 0 : i32
    %c0_i32_1 = arith.constant 0 : i32
    return %c0_i32, %c0_i32_0 : i32, i32
  }
  func.func @transform_10(%arg0: i32) -> (i32, i32) {
    %c0_i32 = arith.constant 0 : i32
    %c0_i32_0 = arith.constant 0 : i32
    %c0_i32_1 = arith.constant 0 : i32
    return %c0_i32, %c0_i32_0 : i32, i32
  }
  func.func @transform_11(%arg0: i32) -> (i32, i32) {
    %c0_i32 = arith.constant 0 : i32
    %c0_i32_0 = arith.constant 0 : i32
    %c0_i32_1 = arith.constant 0 : i32
    return %c0_i32, %c0_i32_0 : i32, i32
  }
  func.func @transform_12(%arg0: i32) -> (i32, i32, i32) {
    %c0_i32 = arith.constant 0 : i32
    %c0_i32_0 = arith.constant 0 : i32
    %c0_i32_1 = arith.constant 0 : i32
    return %arg0, %c0_i32, %c0_i32_0 : i32, i32, i32
  }
}

</mosaic_0001>

<llo_original>
// kernel: tpu_custom_call.1
$region0: #{tpu_custom_call.1}
  #allocation0 [shape = 'u32[]', space=smem, size = 0x4, offset = 0x4, fixed_abs, tag = 'smem constant byte address 0x4 - core index']
  #allocation1 [shape = 'u32[144,128]{1,0:T(1,128)}', space=vmem, size = 0x12000, scoped, tag = 'internal scratch']
  %s0 = inlined_call_operand.hbm [shape: f32[2,8,32], index: 0, kind: input, shape index: {}]
  %s1 = inlined_call_operand.hbm [shape: f32[2,8,32], index: 1, kind: input, shape index: {}]
  %s2 = inlined_call_operand.hbm [shape: f32[2,8,32], index: 2, kind: input, shape index: {}]
  %s3 = inlined_call_operand.vmem [shape: f32[2,1,8], index: 3, kind: input, shape index: {}]
  %s4 = inlined_call_operand.hbm [shape: f32[32,32], index: 4, kind: input, shape index: {}]
  %s5 = inlined_call_operand.vmem [shape: f32[1,32], index: 5, kind: input, shape index: {}]
  %s6 = inlined_call_operand.hbm [shape: f32[32,32], index: 6, kind: input, shape index: {}]
  %s7 = inlined_call_operand.vmem [shape: f32[1,32], index: 7, kind: input, shape index: {}]
  %s8 = inlined_call_operand.hbm [shape: f32[32,32], index: 8, kind: input, shape index: {}]
  %s9 = inlined_call_operand.vmem [shape: f32[1,32], index: 9, kind: input, shape index: {}]
  %s10 = inlined_call_operand.vmem [shape: f32[32,32], index: 10, kind: input, shape index: {}]
  %s11 = inlined_call_operand.vmem [shape: f32[1,32], index: 11, kind: input, shape index: {}]
  %s12 = inlined_call_operand.hbm [shape: f32[2,8,32], index: 12, kind: output, shape index: {}]
  %s13 = sld [smem:[#allocation0]]
  $region105: #{tpu_custom_call.1} parent=0
    _
  %s15 = ssub.s32 1, %s13
  %s16 = scalar_select 0, %s15, %s13
  $region1: #{tpu_custom_call.1} parent=0
    #allocation2 [shape = 'u8[8192]{0}', space=vmem, size = 0x2000, scoped, tag = 'input window, operand 0']
    #allocation3 [shape = 's32[2]{0}', space=sflag, size = 0x8, scoped, tag = 'scoped memory for tpu_custom_call.1']
    #allocation4 [shape = 's32[2]{0}', space=sflag, size = 0x8, scoped, tag = 'scoped memory for tpu_custom_call.1']
    #allocation5 [shape = 'u8[8192]{0}', space=vmem, size = 0x2000, scoped, tag = 'input window, operand 1']
    #allocation6 [shape = 's32[2]{0}', space=sflag, size = 0x8, scoped, tag = 'scoped memory for tpu_custom_call.1']
    #allocation7 [shape = 'u8[8192]{0}', space=vmem, size = 0x2000, scoped, tag = 'input window, operand 2']
    #allocation8 [shape = 'u8[16384]{0}', space=vmem, size = 0x4000, scoped, tag = 'input window, operand 4, single buffered']
    #allocation9 [shape = 's32[1]{0}', space=sflag, size = 0x4, scoped, tag = 'scoped memory for tpu_custom_call.1']
    #allocation10 [shape = 'u8[16384]{0}', space=vmem, size = 0x4000, scoped, tag = 'input window, operand 6, single buffered']
    #allocation11 [shape = 'u8[16384]{0}', space=vmem, size = 0x4000, scoped, tag = 'input window, operand 8, single buffered']
    #allocation12 [shape = 's32[1]{0}', space=sflag, size = 0x4, scoped, tag = 'scoped memory for tpu_custom_call.1']
    #allocation13 [shape = 'u8[8192]{0}', space=vmem, size = 0x2000, scoped, tag = 'output window, operand 0']
    %17 = vsyncpa [#allocation3], 0
    %s18 = scalar_lea.sflag [#allocation3], 1
    %19 = vsyncpa %s18, 0
    %20 = vsyncpa [#allocation6], 0
    %s21 = scalar_lea.sflag [#allocation6], 1
    %22 = vsyncpa %s21, 0
    %23 = vsyncpa [#allocation9], 0
    %24 = vsyncpa [#allocation12], 0
    %25 = vsyncpa [#allocation4], 0
    %s26 = scalar_lea.sflag [#allocation4], 1
    %27 = vsyncpa %s26, 0
    loop: start=0, step=1, limit=4
    $region2: #{tpu_custom_call.1} parent=1 // loop_pre_header
      _
    $region3: #{tpu_custom_call.1} parent=1 // loop_header
      %s29 = sphi 0, %s33
      %p30 = scmp.ge.s32.totalorder %s29, 4
      %s39 = sphi 0, %s41
      %s42 = sphi 0, %s39
      %s43 = sphi 0, %s42
      %s59 = sphi 0, %s43
      %s65 = sphi 0, %s67
      %s68 = sphi 0, %s65
      %s69 = sphi 0, %s68
      %s85 = sphi 0, %s69
      %s91 = sphi 0, %s93
      %s94 = sphi 0, %s91
      %s95 = sphi 0, %s94
      %s111 = sphi 0, %s95
      %s117 = sphi 0, %s119
      %s120 = sphi 0, %s117
      %s121 = sphi 0, %s120
      %s137 = sphi 0, %s121
      %s141 = sphi 0, %s141
      %s143 = sphi 0, %s141
      %s144 = sphi 0, %s143
      %s158 = sphi 0, %s144
      %s162 = sphi 0, %s162
      %s164 = sphi 0, %s162
      %s165 = sphi 0, %s164
      %s179 = sphi 0, %s165
      %s183 = sphi 0, %s183
      %s185 = sphi 0, %s183
      %s186 = sphi 0, %s185
      %s200 = sphi 0, %s186
      %s204 = sphi 0, %s204
      %s206 = sphi 0, %s204
      %s207 = sphi 0, %s206
      %s221 = sphi 0, %s207
      %s225 = sphi 0, %s225
      %s227 = sphi 0, %s225
      %s228 = sphi 0, %s227
      %s242 = sphi 0, %s228
      %s246 = sphi 0, %s246
      %s248 = sphi 0, %s246
      %s249 = sphi 0, %s248
      %s263 = sphi 0, %s249
      %s267 = sphi 0, %s267
      %s269 = sphi 0, %s267
      %s270 = sphi 0, %s269
      %s284 = sphi 0, %s270
      %s288 = sphi 0, %s288
      %s290 = sphi 0, %s288
      %s291 = sphi 0, %s290
      %s305 = sphi 0, %s291
      %s311 = sphi 0, %s313
      %s314 = sphi 0, %s311
      %s315 = sphi 0, %s314
      %s331 = sphi 0, %s315
    $region4: #{tpu_custom_call.1} parent=1 // loop_header_branch
      %32 = sbr.rel (%p30) target = $region8
    $region5: #{tpu_custom_call.1} parent=1 // loop_body
      %s34 = ssub.s32 %s29, 1
      %s35 = ssub.s32 %s29, 2
      %s36 = sadd.s32 %s29, 1
      %s37 = ssub.s32 %s29, %s36
      %p38 = scmp.eq.s32.totalorder %s37, 0
      %s40 = sadd.s32 %s39, 1
      %s41 = scalar_select %p38, %s39, %s40
      %p44 = pneg %p38
      %p45 = scmp.eq.s32.totalorder %s29, 1
      %p46 = por %p44, %p45
      %p47 = scmp.ne.s32.totalorder %s39, %s42
      %p48 = scmp.eq.s32.totalorder %s29, 0
      %p49 = por %p47, %p48
      %p50 = scmp.ne.s32.totalorder %s39, %s42
      %p51 = scmp.eq.s32.totalorder %s34, 1
      %p52 = por %p50, %p51
      %p53 = scmp.ne.s32.totalorder %s42, %s43
      %p54 = scmp.eq.s32.totalorder %s34, 0
      %p55 = por %p53, %p54
      %p56 = scmp.ne.s32.totalorder %s42, %s43
      %p57 = scmp.eq.s32.totalorder %s35, 1
      %p58 = por %p56, %p57
      %p60 = scmp.ne.s32.totalorder %s43, %s59
      %p61 = scmp.eq.s32.totalorder %s35, 0
      %p62 = por %p60, %p61
      %s63 = ssub.s32 %s29, %s36
      %p64 = scmp.eq.s32.totalorder %s63, 0
      %s66 = sadd.s32 %s65, 1
      %s67 = scalar_select %p64, %s65, %s66
      %p70 = pneg %p64
      %p71 = scmp.eq.s32.totalorder %s29, 1
      %p72 = por %p70, %p71
      %p73 = scmp.ne.s32.totalorder %s65, %s68
      %p74 = scmp.eq.s32.totalorder %s29, 0
      %p75 = por %p73, %p74
      %p76 = scmp.ne.s32.totalorder %s65, %s68
      %p77 = scmp.eq.s32.totalorder %s34, 1
      %p78 = por %p76, %p77
      %p79 = scmp.ne.s32.totalorder %s68, %s69
      %p80 = scmp.eq.s32.totalorder %s34, 0
      %p81 = por %p79, %p80
      %p82 = scmp.ne.s32.totalorder %s68, %s69
      %p83 = scmp.eq.s32.totalorder %s35, 1
      %p84 = por %p82, %p83
      %p86 = scmp.ne.s32.totalorder %s69, %s85
      %p87 = scmp.eq.s32.totalorder %s35, 0
      %p88 = por %p86, %p87
      %s89 = ssub.s32 %s29, %s36
      %p90 = scmp.eq.s32.totalorder %s89, 0
      %s92 = sadd.s32 %s91, 1
      %s93 = scalar_select %p90, %s91, %s92
      %p96 = pneg %p90
      %p97 = scmp.eq.s32.totalorder %s29, 1
      %p98 = por %p96, %p97
      %p99 = scmp.ne.s32.totalorder %s91, %s94
      %p100 = scmp.eq.s32.totalorder %s29, 0
      %p101 = por %p99, %p100
      %p102 = scmp.ne.s32.totalorder %s91, %s94
      %p103 = scmp.eq.s32.totalorder %s34, 1
      %p104 = por %p102, %p103
      %p105 = scmp.ne.s32.totalorder %s94, %s95
      %p106 = scmp.eq.s32.totalorder %s34, 0
      %p107 = por %p105, %p106
      %p108 = scmp.ne.s32.totalorder %s94, %s95
      %p109 = scmp.eq.s32.totalorder %s35, 1
      %p110 = por %p108, %p109
      %p112 = scmp.ne.s32.totalorder %s95, %s111
      %p113 = scmp.eq.s32.totalorder %s35, 0
      %p114 = por %p112, %p113
      %s115 = ssub.s32 %s29, %s36
      %p116 = scmp.eq.s32.totalorder %s115, 0
      %s118 = sadd.s32 %s117, 1
      %s119 = scalar_select %p116, %s117, %s118
      %p122 = pneg %p116
      %p123 = scmp.eq.s32.totalorder %s29, 1
      %p124 = por %p122, %p123
      %p125 = scmp.ne.s32.totalorder %s117, %s120
      %p126 = scmp.eq.s32.totalorder %s29, 0
      %p127 = por %p125, %p126
      %p128 = scmp.ne.s32.totalorder %s117, %s120
      %p129 = scmp.eq.s32.totalorder %s34, 1
      %p130 = por %p128, %p129
      %p131 = scmp.ne.s32.totalorder %s120, %s121
      %p132 = scmp.eq.s32.totalorder %s34, 0
      %p133 = por %p131, %p132
      %p134 = scmp.ne.s32.totalorder %s120, %s121
      %p135 = scmp.eq.s32.totalorder %s35, 1
      %p136 = por %p134, %p135
      %p138 = scmp.ne.s32.totalorder %s121, %s137
      %p139 = scmp.eq.s32.totalorder %s35, 0
      %p140 = por %p138, %p139
      %s142 = sadd.s32 %s141, 1
      %p145 = scmp.eq.s32.totalorder %s29, 1
      %p146 = scmp.ne.s32.totalorder %s141, %s143
      %p147 = scmp.eq.s32.totalorder %s29, 0
      %p148 = por %p146, %p147
      %p149 = scmp.ne.s32.totalorder %s141, %s143
      %p150 = scmp.eq.s32.totalorder %s34, 1
      %p151 = por %p149, %p150
      %p152 = scmp.ne.s32.totalorder %s143, %s144
      %p153 = scmp.eq.s32.totalorder %s34, 0
      %p154 = por %p152, %p153
      %p155 = scmp.ne.s32.totalorder %s143, %s144
      %p156 = scmp.eq.s32.totalorder %s35, 1
      %p157 = por %p155, %p156
      %p159 = scmp.ne.s32.totalorder %s144, %s158
      %p160 = scmp.eq.s32.totalorder %s35, 0
      %p161 = por %p159, %p160
      %s163 = sadd.s32 %s162, 1
      %p166 = scmp.eq.s32.totalorder %s29, 1
      %p167 = scmp.ne.s32.totalorder %s162, %s164
      %p168 = scmp.eq.s32.totalorder %s29, 0
      %p169 = por %p167, %p168
      %p170 = scmp.ne.s32.totalorder %s162, %s164
      %p171 = scmp.eq.s32.totalorder %s34, 1
      %p172 = por %p170, %p171
      %p173 = scmp.ne.s32.totalorder %s164, %s165
      %p174 = scmp.eq.s32.totalorder %s34, 0
      %p175 = por %p173, %p174
      %p176 = scmp.ne.s32.totalorder %s164, %s165
      %p177 = scmp.eq.s32.totalorder %s35, 1
      %p178 = por %p176, %p177
      %p180 = scmp.ne.s32.totalorder %s165, %s179
      %p181 = scmp.eq.s32.totalorder %s35, 0
      %p182 = por %p180, %p181
      %s184 = sadd.s32 %s183, 1
      %p187 = scmp.eq.s32.totalorder %s29, 1
      %p188 = scmp.ne.s32.totalorder %s183, %s185
      %p189 = scmp.eq.s32.totalorder %s29, 0
      %p190 = por %p188, %p189
      %p191 = scmp.ne.s32.totalorder %s183, %s185
      %p192 = scmp.eq.s32.totalorder %s34, 1
      %p193 = por %p191, %p192
      %p194 = scmp.ne.s32.totalorder %s185, %s186
      %p195 = scmp.eq.s32.totalorder %s34, 0
      %p196 = por %p194, %p195
      %p197 = scmp.ne.s32.totalorder %s185, %s186
      %p198 = scmp.eq.s32.totalorder %s35, 1
      %p199 = por %p197, %p198
      %p201 = scmp.ne.s32.totalorder %s186, %s200
      %p202 = scmp.eq.s32.totalorder %s35, 0
      %p203 = por %p201, %p202
      %s205 = sadd.s32 %s204, 1
      %p208 = scmp.eq.s32.totalorder %s29, 1
      %p209 = scmp.ne.s32.totalorder %s204, %s206
      %p210 = scmp.eq.s32.totalorder %s29, 0
      %p211 = por %p209, %p210
      %p212 = scmp.ne.s32.totalorder %s204, %s206
      %p213 = scmp.eq.s32.totalorder %s34, 1
      %p214 = por %p212, %p213
      %p215 = scmp.ne.s32.totalorder %s206, %s207
      %p216 = scmp.eq.s32.totalorder %s34, 0
      %p217 = por %p215, %p216
      %p218 = scmp.ne.s32.totalorder %s206, %s207
      %p219 = scmp.eq.s32.totalorder %s35, 1
      %p220 = por %p218, %p219
      %p222 = scmp.ne.s32.totalorder %s207, %s221
      %p223 = scmp.eq.s32.totalorder %s35, 0
      %p224 = por %p222, %p223
      %s226 = sadd.s32 %s225, 1
      %p229 = scmp.eq.s32.totalorder %s29, 1
      %p230 = scmp.ne.s32.totalorder %s225, %s227
      %p231 = scmp.eq.s32.totalorder %s29, 0
      %p232 = por %p230, %p231
      %p233 = scmp.ne.s32.totalorder %s225, %s227
      %p234 = scmp.eq.s32.totalorder %s34, 1
      %p235 = por %p233, %p234
      %p236 = scmp.ne.s32.totalorder %s227, %s228
      %p237 = scmp.eq.s32.totalorder %s34, 0
      %p238 = por %p236, %p237
      %p239 = scmp.ne.s32.totalorder %s227, %s228
      %p240 = scmp.eq.s32.totalorder %s35, 1
      %p241 = por %p239, %p240
      %p243 = scmp.ne.s32.totalorder %s228, %s242
      %p244 = scmp.eq.s32.totalorder %s35, 0
      %p245 = por %p243, %p244
      %s247 = sadd.s32 %s246, 1
      %p250 = scmp.eq.s32.totalorder %s29, 1
      %p251 = scmp.ne.s32.totalorder %s246, %s248
      %p252 = scmp.eq.s32.totalorder %s29, 0
      %p253 = por %p251, %p252
      %p254 = scmp.ne.s32.totalorder %s246, %s248
      %p255 = scmp.eq.s32.totalorder %s34, 1
      %p256 = por %p254, %p255
      %p257 = scmp.ne.s32.totalorder %s248, %s249
      %p258 = scmp.eq.s32.totalorder %s34, 0
      %p259 = por %p257, %p258
      %p260 = scmp.ne.s32.totalorder %s248, %s249
      %p261 = scmp.eq.s32.totalorder %s35, 1
      %p262 = por %p260, %p261
      %p264 = scmp.ne.s32.totalorder %s249, %s263
      %p265 = scmp.eq.s32.totalorder %s35, 0
      %p266 = por %p264, %p265
      %s268 = sadd.s32 %s267, 1
      %p271 = scmp.eq.s32.totalorder %s29, 1
      %p272 = scmp.ne.s32.totalorder %s267, %s269
      %p273 = scmp.eq.s32.totalorder %s29, 0
      %p274 = por %p272, %p273
      %p275 = scmp.ne.s32.totalorder %s267, %s269
      %p276 = scmp.eq.s32.totalorder %s34, 1
      %p277 = por %p275, %p276
      %p278 = scmp.ne.s32.totalorder %s269, %s270
      %p279 = scmp.eq.s32.totalorder %s34, 0
      %p280 = por %p278, %p279
      %p281 = scmp.ne.s32.totalorder %s269, %s270
      %p282 = scmp.eq.s32.totalorder %s35, 1
      %p283 = por %p281, %p282
      %p285 = scmp.ne.s32.totalorder %s270, %s284
      %p286 = scmp.eq.s32.totalorder %s35, 0
      %p287 = por %p285, %p286
      %s289 = sadd.s32 %s288, 1
      %p292 = scmp.eq.s32.totalorder %s29, 1
      %p293 = scmp.ne.s32.totalorder %s288, %s290
      %p294 = scmp.eq.s32.totalorder %s29, 0
      %p295 = por %p293, %p294
      %p296 = scmp.ne.s32.totalorder %s288, %s290
      %p297 = scmp.eq.s32.totalorder %s34, 1
      %p298 = por %p296, %p297
      %p299 = scmp.ne.s32.totalorder %s290, %s291
      %p300 = scmp.eq.s32.totalorder %s34, 0
      %p301 = por %p299, %p300
      %p302 = scmp.ne.s32.totalorder %s290, %s291
      %p303 = scmp.eq.s32.totalorder %s35, 1
      %p304 = por %p302, %p303
      %p306 = scmp.ne.s32.totalorder %s291, %s305
      %p307 = scmp.eq.s32.totalorder %s35, 0
      %p308 = por %p306, %p307
      %s309 = ssub.s32 %s29, %s36
      %p310 = scmp.eq.s32.totalorder %s309, 0
      %s312 = sadd.s32 %s311, 1
      %s313 = scalar_select %p310, %s311, %s312
      %p316 = pneg %p310
      %p317 = scmp.eq.s32.totalorder %s29, 1
      %p318 = por %p316, %p317
      %p319 = scmp.ne.s32.totalorder %s311, %s314
      %p320 = scmp.eq.s32.totalorder %s29, 0
      %p321 = por %p319, %p320
      %p322 = scmp.ne.s32.totalorder %s311, %s314
      %p323 = scmp.eq.s32.totalorder %s34, 1
      %p324 = por %p322, %p323
      %p325 = scmp.ne.s32.totalorder %s314, %s315
      %p326 = scmp.eq.s32.totalorder %s34, 0
      %p327 = por %p325, %p326
      %p328 = scmp.ne.s32.totalorder %s314, %s315
      %p329 = scmp.eq.s32.totalorder %s35, 1
      %p330 = por %p328, %p329
      %p332 = scmp.ne.s32.totalorder %s315, %s331
      %p333 = scmp.eq.s32.totalorder %s35, 0
      %p334 = por %p332, %p333
      %p335 = scmp.le.s32.totalorder 1, %s29
      %p336 = scmp.lt.s32.totalorder %s29, 3
      %p337 = pnand %p335, %p336
      %p338 = pneg %p337
      // Predicated region
      $region9: #{tpu_custom_call.1} parent=5 // pred_check
        _
      $region10: #{tpu_custom_call.1} parent=5 // pred_check_branch
        %340 = sbr.rel (%p337) target = $region12
      $region11: #{tpu_custom_call.1} parent=5 // pred_region
        %s341 = ssub.s32 %s29, 1
        // Predicated region
        $region13: #{tpu_custom_call.1} parent=11 // pred_check
          %p342 = pneg %p154
        $region14: #{tpu_custom_call.1} parent=11 // pred_check_branch
          %344 = sbr.rel (%p342) target = $region16
        $region15: #{tpu_custom_call.1} parent=11 // pred_region
          %s346 = ssub.s32 512, 512
          %347 = vsyncadd [#allocation9], %s346
          %s348 = sshll.u32 [#allocation8], 4
          %s349 = int_to_ptr.vmem [resolvable:$true] %s348
          %354 = dma.hbm_to_vmem [thread:$0]  %s4, 512, %s349, [#allocation9], 128, 128, 8
        $region16: #{tpu_custom_call.1} parent=11 // pred_fallthru
          _
        // Predicated region
        $region17: #{tpu_custom_call.1} parent=11 // pred_check
          %p355 = pneg %p175
        $region18: #{tpu_custom_call.1} parent=11 // pred_check_branch
          %357 = sbr.rel (%p355) target = $region20
        $region19: #{tpu_custom_call.1} parent=11 // pred_region
          _
        $region20: #{tpu_custom_call.1} parent=11 // pred_fallthru
          _
        // Predicated region
        $region21: #{tpu_custom_call.1} parent=11 // pred_check
          %p358 = pneg %p196
        $region22: #{tpu_custom_call.1} parent=11 // pred_check_branch
          %360 = sbr.rel (%p358) target = $region24
        $region23: #{tpu_custom_call.1} parent=11 // pred_region
          %s362 = ssub.s32 512, 512
          %363 = vsyncadd [#allocation9], %s362
          %s364 = sshll.u32 [#allocation10], 4
          %s365 = int_to_ptr.vmem [resolvable:$true] %s364
          %370 = dma.hbm_to_vmem [thread:$0]  %s6, 512, %s365, [#allocation9], 128, 128, 8
        $region24: #{tpu_custom_call.1} parent=11 // pred_fallthru
          _
        // Predicated region
        $region25: #{tpu_custom_call.1} parent=11 // pred_check
          %p371 = pneg %p217
        $region26: #{tpu_custom_call.1} parent=11 // pred_check_branch
          %373 = sbr.rel (%p371) target = $region28
        $region27: #{tpu_custom_call.1} parent=11 // pred_region
          _
        $region28: #{tpu_custom_call.1} parent=11 // pred_fallthru
          _
        // Predicated region
        $region29: #{tpu_custom_call.1} parent=11 // pred_check
          %p374 = pneg %p238
        $region30: #{tpu_custom_call.1} parent=11 // pred_check_branch
          %376 = sbr.rel (%p374) target = $region32
        $region31: #{tpu_custom_call.1} parent=11 // pred_region
          %s378 = ssub.s32 512, 512
          %379 = vsyncadd [#allocation12], %s378
          %s380 = sshll.u32 [#allocation11], 4
          %s381 = int_to_ptr.vmem [resolvable:$true] %s380
          %386 = dma.hbm_to_vmem [thread:$0]  %s8, 512, %s381, [#allocation12], 128, 128, 8
        $region32: #{tpu_custom_call.1} parent=11 // pred_fallthru
          _
        // Predicated region
        $region33: #{tpu_custom_call.1} parent=11 // pred_check
          %p387 = pneg %p259
        $region34: #{tpu_custom_call.1} parent=11 // pred_check_branch
          %389 = sbr.rel (%p387) target = $region36
        $region35: #{tpu_custom_call.1} parent=11 // pred_region
          _
        $region36: #{tpu_custom_call.1} parent=11 // pred_fallthru
          _
        // Predicated region
        $region37: #{tpu_custom_call.1} parent=11 // pred_check
          %p390 = pneg %p280
        $region38: #{tpu_custom_call.1} parent=11 // pred_check_branch
          %392 = sbr.rel (%p390) target = $region40
        $region39: #{tpu_custom_call.1} parent=11 // pred_region
          _
        $region40: #{tpu_custom_call.1} parent=11 // pred_fallthru
          _
        // Predicated region
        $region41: #{tpu_custom_call.1} parent=11 // pred_check
          %p393 = pneg %p301
        $region42: #{tpu_custom_call.1} parent=11 // pred_check_branch
          %395 = sbr.rel (%p393) target = $region44
        $region43: #{tpu_custom_call.1} parent=11 // pred_region
          _
        $region44: #{tpu_custom_call.1} parent=11 // pred_fallthru
          _
      $region12: #{tpu_custom_call.1} parent=5 // pred_fallthru
        _
      %p396 = scmp.lt.s32.totalorder %s29, 2
      // Predicated region
      $region45: #{tpu_custom_call.1} parent=5 // pred_check
        %p397 = pneg %p396
      $region46: #{tpu_custom_call.1} parent=5 // pred_check_branch
        %399 = sbr.rel (%p397) target = $region48
      $region47: #{tpu_custom_call.1} parent=5 // pred_region
        // Predicated region
        $region49: #{tpu_custom_call.1} parent=47 // pred_check
          %p400 = pneg %p49
        $region50: #{tpu_custom_call.1} parent=47 // pred_check_branch
          %402 = sbr.rel (%p400) target = $region52
        $region51: #{tpu_custom_call.1} parent=47 // pred_region
          %s403 = sand.u32 %s39, 1
          %s404 = scalar_lea.sflag [#allocation3], %s403
          %s405 = sand.u32 %s39, 1
          %s406 = smul.addr %s405, 8
          %s407 = scalar_lea.vmem [#allocation2], %s406
          %s409 = ssub.s32 128, 128
          %410 = vsyncadd %s404, %s409
          %s411 = smul.addr %s29, 128
          %s412 = scalar_lea.hbm %s0, %s411
          %s414 = sshll.u32 %s407, 4
          %s415 = int_to_ptr.vmem [resolvable:$true] %s414
          %417 = dma.hbm_to_vmem [thread:$0]  %s412, 128, %s415, %s404
        $region52: #{tpu_custom_call.1} parent=47 // pred_fallthru
          _
        // Predicated region
        $region53: #{tpu_custom_call.1} parent=47 // pred_check
          %p418 = pneg %p75
        $region54: #{tpu_custom_call.1} parent=47 // pred_check_branch
          %420 = sbr.rel (%p418) target = $region56
        $region55: #{tpu_custom_call.1} parent=47 // pred_region
          %s421 = sand.u32 %s29, 1
          %s422 = scalar_lea.sflag [#allocation6], %s421
          %s423 = sand.u32 %s65, 1
          %s424 = smul.addr %s423, 8
          %s425 = scalar_lea.vmem [#allocation5], %s424
          %s427 = ssub.s32 128, 128
          %428 = vsyncadd %s422, %s427
          %s429 = smul.addr %s29, 128
          %s430 = scalar_lea.hbm %s1, %s429
          %s432 = sshll.u32 %s425, 4
          %s433 = int_to_ptr.vmem [resolvable:$true] %s432
          %435 = dma.hbm_to_vmem [thread:$0]  %s430, 128, %s433, %s422
        $region56: #{tpu_custom_call.1} parent=47 // pred_fallthru
          _
        // Predicated region
        $region57: #{tpu_custom_call.1} parent=47 // pred_check
          %p436 = pneg %p101
        $region58: #{tpu_custom_call.1} parent=47 // pred_check_branch
          %438 = sbr.rel (%p436) target = $region60
        $region59: #{tpu_custom_call.1} parent=47 // pred_region
          %s439 = sand.u32 %s29, 1
          %s440 = scalar_lea.sflag [#allocation6], %s439
          %s441 = sand.u32 %s91, 1
          %s442 = smul.addr %s441, 8
          %s443 = scalar_lea.vmem [#allocation7], %s442
          %s445 = ssub.s32 128, 128
          %446 = vsyncadd %s440, %s445
          %s447 = smul.addr %s29, 128
          %s448 = scalar_lea.hbm %s2, %s447
          %s450 = sshll.u32 %s443, 4
          %s451 = int_to_ptr.vmem [resolvable:$true] %s450
          %453 = dma.hbm_to_vmem [thread:$0]  %s448, 128, %s451, %s440
        $region60: #{tpu_custom_call.1} parent=47 // pred_fallthru
          _
        // Predicated region
        $region61: #{tpu_custom_call.1} parent=47 // pred_check
          %p454 = pneg %p127
        $region62: #{tpu_custom_call.1} parent=47 // pred_check_branch
          %456 = sbr.rel (%p454) target = $region64
        $region63: #{tpu_custom_call.1} parent=47 // pred_region
          %p457 = scmp.lt.s32.totalorder %s29, 1
          %s458 = scalar_select %p457, %s29, 1
          %s459 = scalar_lea.vmem %s3, %s458
        $region64: #{tpu_custom_call.1} parent=47 // pred_fallthru
          _
      $region48: #{tpu_custom_call.1} parent=5 // pred_fallthru
        _
      %p460 = scmp.le.s32.totalorder 1, %s29
      %p461 = scmp.lt.s32.totalorder %s29, 3
      %p462 = pnand %p460, %p461
      %p463 = pneg %p462
      // Predicated region
      $region65: #{tpu_custom_call.1} parent=5 // pred_check
        _
      $region66: #{tpu_custom_call.1} parent=5 // pred_check_branch
        %465 = sbr.rel (%p462) target = $region68
      $region67: #{tpu_custom_call.1} parent=5 // pred_region
        %s466 = ssub.s32 %s29, 1
        %s467 = sand.u32 %s42, 1
        %s468 = scalar_lea.sflag [#allocation3], %s467
        %s469 = sand.u32 %s42, 1
        %s470 = smul.addr %s469, 8
        %s471 = scalar_lea.vmem [#allocation2], %s470
        // Predicated region
        $region69: #{tpu_custom_call.1} parent=67 // pred_check
          %p472 = pneg %p55
        $region70: #{tpu_custom_call.1} parent=67 // pred_check_branch
          %474 = sbr.rel (%p472) target = $region72
        $region71: #{tpu_custom_call.1} parent=67 // pred_region
          %475 = dma.done %s468, 128
        $region72: #{tpu_custom_call.1} parent=67 // pred_fallthru
          _
        %s476 = sand.u32 %s34, 1
        %s477 = scalar_lea.sflag [#allocation6], %s476
        %s478 = sand.u32 %s68, 1
        %s479 = smul.addr %s478, 8
        %s480 = scalar_lea.vmem [#allocation5], %s479
        // Predicated region
        $region73: #{tpu_custom_call.1} parent=67 // pred_check
          %p481 = pneg %p81
        $region74: #{tpu_custom_call.1} parent=67 // pred_check_branch
          %483 = sbr.rel (%p481) target = $region76
        $region75: #{tpu_custom_call.1} parent=67 // pred_region
          %484 = dma.done %s477, 128
        $region76: #{tpu_custom_call.1} parent=67 // pred_fallthru
          _
        %s485 = sand.u32 %s34, 1
        %s486 = scalar_lea.sflag [#allocation6], %s485
        %s487 = sand.u32 %s94, 1
        %s488 = smul.addr %s487, 8
        %s489 = scalar_lea.vmem [#allocation7], %s488
        // Predicated region
        $region77: #{tpu_custom_call.1} parent=67 // pred_check
          %p490 = pneg %p107
        $region78: #{tpu_custom_call.1} parent=67 // pred_check_branch
          %492 = sbr.rel (%p490) target = $region80
        $region79: #{tpu_custom_call.1} parent=67 // pred_region
          %493 = dma.done %s486, 128
        $region80: #{tpu_custom_call.1} parent=67 // pred_fallthru
          _
        // Predicated region
        $region81: #{tpu_custom_call.1} parent=67 // pred_check
          %p494 = pneg %p154
        $region82: #{tpu_custom_call.1} parent=67 // pred_check_branch
          %496 = sbr.rel (%p494) target = $region84
        $region83: #{tpu_custom_call.1} parent=67 // pred_region
          %497 = dma.done [#allocation9], 512
        $region84: #{tpu_custom_call.1} parent=67 // pred_fallthru
          _
        // Predicated region
        $region85: #{tpu_custom_call.1} parent=67 // pred_check
          %p498 = pneg %p196
        $region86: #{tpu_custom_call.1} parent=67 // pred_check_branch
          %500 = sbr.rel (%p498) target = $region88
        $region87: #{tpu_custom_call.1} parent=67 // pred_region
          %501 = dma.done [#allocation9], 512
        $region88: #{tpu_custom_call.1} parent=67 // pred_fallthru
          _
        // Predicated region
        $region89: #{tpu_custom_call.1} parent=67 // pred_check
          %p502 = pneg %p238
        $region90: #{tpu_custom_call.1} parent=67 // pred_check_branch
          %504 = sbr.rel (%p502) target = $region92
        $region91: #{tpu_custom_call.1} parent=67 // pred_region
          %505 = dma.done [#allocation12], 512
        $region92: #{tpu_custom_call.1} parent=67 // pred_fallthru
          _
        %s506 = sand.u32 %s42, 1
        %s507 = scalar_lea.sflag [#allocation3], %s506
        %s508 = sand.u32 %s42, 1
        %s509 = smul.addr %s508, 8
        %s510 = scalar_lea.vmem [#allocation2], %s509
        %p511 = pneg %p55
        %p512 = pneg %p52
        %s513 = sand.u32 %s34, 1
        %s514 = scalar_lea.sflag [#allocation6], %s513
        %s515 = sand.u32 %s68, 1
        %s516 = smul.addr %s515, 8
        %s517 = scalar_lea.vmem [#allocation5], %s516
        %p518 = pneg %p81
        %p519 = pneg %p78
        %s520 = sand.u32 %s34, 1
        %s521 = scalar_lea.sflag [#allocation6], %s520
        %s522 = sand.u32 %s94, 1
        %s523 = smul.addr %s522, 8
        %s524 = scalar_lea.vmem [#allocation7], %s523
        %p525 = pneg %p107
        %p526 = pneg %p104
        %p527 = scmp.lt.s32.totalorder %s34, 1
        %s528 = scalar_select %p527, %s34, 1
        %s529 = scalar_lea.vmem %s3, %s528
        %p530 = pneg %p133
        %p531 = pneg %p130
        %p532 = pneg %p154
        %p533 = pneg %p151
        %p534 = pneg %p175
        %p535 = pneg %p172
        %p536 = pneg %p196
        %p537 = pneg %p193
        %p538 = pneg %p217
        %p539 = pneg %p214
        %p540 = pneg %p238
        %p541 = pneg %p235
        %p542 = pneg %p259
        %p543 = pneg %p256
        %p544 = pneg %p280
        %p545 = pneg %p277
        %p546 = pneg %p301
        %p547 = pneg %p298
        %p548 = pneg %p327
        %p549 = pneg %p324
        %s550 = sand.u32 %s314, 1
        %s551 = scalar_lea.sflag [#allocation4], %s550
        %s552 = sand.u32 %s314, 1
        %s553 = smul.addr %s552, 8
        %s554 = scalar_lea.vmem [#allocation13], %s553
        %p555 = scmp.lt.s32.totalorder %s34, 1
        %s556 = scalar_select %p555, %s34, 1
        %s557 = scalar_lea.vmem %s3, %s556
        %v558 = vld [vmem:[%s471] sm:$0xff]
        %v559 = vld [vmem:[%s480] sm:$0xff]
        %v560 = vld [vmem:[%s489] sm:$0xff]
        %v561 = vld [vmem:[#allocation8] sm:$0xff]
        %v562 = vld [vmem:[#allocation8 + $0x8] sm:$0xff]
        %v563 = vld [vmem:[#allocation8 + $0x10] sm:$0xff]
        %v564 = vld [vmem:[#allocation8 + $0x18] sm:$0xff]
        %v565 = vld [vmem:[%s5] sm:$0x1]
        %v567 = vlaneseq
        %v568 = vshrl.u32 %v567, 7
        %v569 = vsub.s32 0, %v568
        %v570 = vrot.slane %v565, %v569
        %vm572 = vcmask 261120
        %v574 = vsel %vm572, %v558, 0
        %576 = vmatprep.subr.mxu0 0.0
        %577 = vmatpush1.msra.mxu0 %v561
        %578 = vmatprep.subr.mxu0 0.0
        %579 = vmatpush1.msra.mxu0 %v562
        %580 = vmatprep.subr.mxu0 0.0
        %581 = vmatpush1.msra.mxu0 %v563
        %582 = vmatprep.subr.mxu0 0.0
        %583 = vmatpush1.msra.mxu0 %v564
        %584 = vmatprep.subr.mxu0 0.0
        %585 = vmatpush1.msra.mxu0 0.0
        %586 = vmatprep.subr.mxu0 0.0
        %587 = vmatpush1.msra.mxu0 0.0
        %588 = vmatprep.subr.mxu0 0.0
        %589 = vmatpush1.msra.mxu0 0.0
        %590 = vmatprep.subr.mxu0 0.0
        %591 = vmatpush1.msra.mxu0 0.0
        %592 = vmatprep.subr.mxu0 0.0
        %593 = vmatpush1.msra.mxu0 0.0
        %594 = vmatprep.subr.mxu0 0.0
        %595 = vmatpush1.msra.mxu0 0.0
        %596 = vmatprep.subr.mxu0 0.0
        %597 = vmatpush1.msra.mxu0 0.0
        %598 = vmatprep.subr.mxu0 0.0
        %599 = vmatpush1.msra.mxu0 0.0
        %600 = vmatprep.subr.mxu0 0.0
        %601 = vmatpush1.msra.mxu0 0.0
        %602 = vmatprep.subr.mxu0 0.0
        %603 = vmatpush1.msra.mxu0 0.0
        %604 = vmatprep.subr.mxu0 0.0
        %605 = vmatpush1.msra.mxu0 0.0
        %606 = vmatprep.subr.mxu0 0.0
        %607 = vmatpush1.msra.mxu0 0.0
        %608 = vmatprep.subr.mxu0 0.0
        %609 = vmatpush1.msra.mxu0 0.0
        %610 = vmatprep.subr.mxu0 0.0
        %611 = vmatpush1.msra.mxu0 0.0
        %612 = vmatprep.subr.mxu0 0.0
        %613 = vmatpush1.msra.mxu0 0.0
        %614 = vmatprep.subr.mxu0 0.0
        %615 = vmatpush1.msra.mxu0 0.0
        %616 = vmatprep.subr.mxu0 0.0
        %617 = vmatpush1.msra.mxu0 0.0
        %618 = vmatprep.subr.mxu0 0.0
        %619 = vmatpush1.msra.mxu0 0.0
        %620 = vmatprep.subr.mxu0 0.0
        %621 = vmatpush1.msra.mxu0 0.0
        %622 = vmatprep.subr.mxu0 0.0
        %623 = vmatpush1.msra.mxu0 0.0
        %624 = vmatprep.subr.mxu0 0.0
        %625 = vmatpush1.msra.mxu0 0.0
        %626 = vmatprep.subr.mxu0 0.0
        %627 = vmatpush1.msra.mxu0 0.0
        %628 = vmatprep.subr.mxu0 0.0
        %629 = vmatpush1.msra.mxu0 0.0
        %630 = vmatprep.subr.mxu0 0.0
        %631 = vmatpush1.msra.mxu0 0.0
        %632 = vmatprep.subr.mxu0 0.0
        %633 = vmatpush1.msra.mxu0 0.0
        %634 = vmatprep.subr.mxu0 0.0
        %635 = vmatpush1.msra.mxu0 0.0
        %636 = vmatprep.subr.mxu0 0.0
        %637 = vmatpush1.msra.mxu0 0.0
        %638 = vmatprep.subr.mxu0 0.0
        %639 = vmatpush1.msra.mxu0 0.0
        %640 = vmatprep.mubr.f32.mxu0 0.0
        %641 = vmatmul.mubr.f32.gmra.mrb[0].mxu0 %v574
        %v642 = vpop.f32.mrb[0].mxu0
        %v643 = vadd.f32 %v570, %v642
        %v644 = vpop.f32.mrb[0].mxu0
        %645 = vdwg.mxu0
        %v646 = vld [vmem:[#allocation10] sm:$0xff]
        %v647 = vld [vmem:[#allocation10 + $0x8] sm:$0xff]
        %v648 = vld [vmem:[#allocation10 + $0x10] sm:$0xff]
        %v649 = vld [vmem:[#allocation10 + $0x18] sm:$0xff]
        %v650 = vld [vmem:[%s7] sm:$0x1]
        %v652 = vlaneseq
        %v653 = vshrl.u32 %v652, 7
        %v654 = vsub.s32 0, %v653
        %v655 = vrot.slane %v650, %v654
        %v658 = vsel %vm572, %v559, 0
        %660 = vmatprep.subr.mxu0 0.0
        %661 = vmatpush1.msra.mxu0 %v646
        %662 = vmatprep.subr.mxu0 0.0
        %663 = vmatpush1.msra.mxu0 %v647
        %664 = vmatprep.subr.mxu0 0.0
        %665 = vmatpush1.msra.mxu0 %v648
        %666 = vmatprep.subr.mxu0 0.0
        %667 = vmatpush1.msra.mxu0 %v649
        %668 = vmatprep.subr.mxu0 0.0
        %669 = vmatpush1.msra.mxu0 0.0
        %670 = vmatprep.subr.mxu0 0.0
        %671 = vmatpush1.msra.mxu0 0.0
        %672 = vmatprep.subr.mxu0 0.0
        %673 = vmatpush1.msra.mxu0 0.0
        %674 = vmatprep.subr.mxu0 0.0
        %675 = vmatpush1.msra.mxu0 0.0
        %676 = vmatprep.subr.mxu0 0.0
        %677 = vmatpush1.msra.mxu0 0.0
        %678 = vmatprep.subr.mxu0 0.0
        %679 = vmatpush1.msra.mxu0 0.0
        %680 = vmatprep.subr.mxu0 0.0
        %681 = vmatpush1.msra.mxu0 0.0
        %682 = vmatprep.subr.mxu0 0.0
        %683 = vmatpush1.msra.mxu0 0.0
        %684 = vmatprep.subr.mxu0 0.0
        %685 = vmatpush1.msra.mxu0 0.0
        %686 = vmatprep.subr.mxu0 0.0
        %687 = vmatpush1.msra.mxu0 0.0
        %688 = vmatprep.subr.mxu0 0.0
        %689 = vmatpush1.msra.mxu0 0.0
        %690 = vmatprep.subr.mxu0 0.0
        %691 = vmatpush1.msra.mxu0 0.0
        %692 = vmatprep.subr.mxu0 0.0
        %693 = vmatpush1.msra.mxu0 0.0
        %694 = vmatprep.subr.mxu0 0.0
        %695 = vmatpush1.msra.mxu0 0.0
        %696 = vmatprep.subr.mxu0 0.0
        %697 = vmatpush1.msra.mxu0 0.0
        %698 = vmatprep.subr.mxu0 0.0
        %699 = vmatpush1.msra.mxu0 0.0
        %700 = vmatprep.subr.mxu0 0.0
        %701 = vmatpush1.msra.mxu0 0.0
        %702 = vmatprep.subr.mxu0 0.0
        %703 = vmatpush1.msra.mxu0 0.0
        %704 = vmatprep.subr.mxu0 0.0
        %705 = vmatpush1.msra.mxu0 0.0
        %706 = vmatprep.subr.mxu0 0.0
        %707 = vmatpush1.msra.mxu0 0.0
        %708 = vmatprep.subr.mxu0 0.0
        %709 = vmatpush1.msra.mxu0 0.0
        %710 = vmatprep.subr.mxu0 0.0
        %711 = vmatpush1.msra.mxu0 0.0
        %712 = vmatprep.subr.mxu0 0.0
        %713 = vmatpush1.msra.mxu0 0.0
        %714 = vmatprep.subr.mxu0 0.0
        %715 = vmatpush1.msra.mxu0 0.0
        %716 = vmatprep.subr.mxu0 0.0
        %717 = vmatpush1.msra.mxu0 0.0
        %718 = vmatprep.subr.mxu0 0.0
        %719 = vmatpush1.msra.mxu0 0.0
        %720 = vmatprep.subr.mxu0 0.0
        %721 = vmatpush1.msra.mxu0 0.0
        %722 = vmatprep.subr.mxu0 0.0
        %723 = vmatpush1.msra.mxu0 0.0
        %724 = vmatprep.mubr.f32.mxu0 0.0
        %725 = vmatmul.mubr.f32.gmra.mrb[0].mxu0 %v658
        %v726 = vpop.f32.mrb[0].mxu0
        %v727 = vadd.f32 %v655, %v726
        %v728 = vpop.f32.mrb[0].mxu0
        %729 = vdwg.mxu0
        %v730 = vld [vmem:[#allocation11] sm:$0xff]
        %v731 = vld [vmem:[#allocation11 + $0x8] sm:$0xff]
        %v732 = vld [vmem:[#allocation11 + $0x10] sm:$0xff]
        %v733 = vld [vmem:[#allocation11 + $0x18] sm:$0xff]
        %v734 = vld [vmem:[%s9] sm:$0x1]
        %v736 = vlaneseq
        %v737 = vshrl.u32 %v736, 7
        %v738 = vsub.s32 0, %v737
        %v739 = vrot.slane %v734, %v738
        %v742 = vsel %vm572, %v560, 0
        %744 = vmatprep.subr.mxu0 0.0
        %745 = vmatpush1.msra.mxu0 %v730
        %746 = vmatprep.subr.mxu0 0.0
        %747 = vmatpush1.msra.mxu0 %v731
        %748 = vmatprep.subr.mxu0 0.0
        %749 = vmatpush1.msra.mxu0 %v732
        %750 = vmatprep.subr.mxu0 0.0
        %751 = vmatpush1.msra.mxu0 %v733
        %752 = vmatprep.subr.mxu0 0.0
        %753 = vmatpush1.msra.mxu0 0.0
        %754 = vmatprep.subr.mxu0 0.0
        %755 = vmatpush1.msra.mxu0 0.0
        %756 = vmatprep.subr.mxu0 0.0
        %757 = vmatpush1.msra.mxu0 0.0
        %758 = vmatprep.subr.mxu0 0.0
        %759 = vmatpush1.msra.mxu0 0.0
        %760 = vmatprep.subr.mxu0 0.0
        %761 = vmatpush1.msra.mxu0 0.0
        %762 = vmatprep.subr.mxu0 0.0
        %763 = vmatpush1.msra.mxu0 0.0
        %764 = vmatprep.subr.mxu0 0.0
        %765 = vmatpush1.msra.mxu0 0.0
        %766 = vmatprep.subr.mxu0 0.0
        %767 = vmatpush1.msra.mxu0 0.0
        %768 = vmatprep.subr.mxu0 0.0
        %769 = vmatpush1.msra.mxu0 0.0
        %770 = vmatprep.subr.mxu0 0.0
        %771 = vmatpush1.msra.mxu0 0.0
        %772 = vmatprep.subr.mxu0 0.0
        %773 = vmatpush1.msra.mxu0 0.0
        %774 = vmatprep.subr.mxu0 0.0
        %775 = vmatpush1.msra.mxu0 0.0
        %776 = vmatprep.subr.mxu0 0.0
        %777 = vmatpush1.msra.mxu0 0.0
        %778 = vmatprep.subr.mxu0 0.0
        %779 = vmatpush1.msra.mxu0 0.0
        %780 = vmatprep.subr.mxu0 0.0
        %781 = vmatpush1.msra.mxu0 0.0
        %782 = vmatprep.subr.mxu0 0.0
        %783 = vmatpush1.msra.mxu0 0.0
        %784 = vmatprep.subr.mxu0 0.0
        %785 = vmatpush1.msra.mxu0 0.0
        %786 = vmatprep.subr.mxu0 0.0
        %787 = vmatpush1.msra.mxu0 0.0
        %788 = vmatprep.subr.mxu0 0.0
        %789 = vmatpush1.msra.mxu0 0.0
        %790 = vmatprep.subr.mxu0 0.0
        %791 = vmatpush1.msra.mxu0 0.0
        %792 = vmatprep.subr.mxu0 0.0
        %793 = vmatpush1.msra.mxu0 0.0
        %794 = vmatprep.subr.mxu0 0.0
        %795 = vmatpush1.msra.mxu0 0.0
        %796 = vmatprep.subr.mxu0 0.0
        %797 = vmatpush1.msra.mxu0 0.0
        %798 = vmatprep.subr.mxu0 0.0
        %799 = vmatpush1.msra.mxu0 0.0
        %800 = vmatprep.subr.mxu0 0.0
        %801 = vmatpush1.msra.mxu0 0.0
        %802 = vmatprep.subr.mxu0 0.0
        %803 = vmatpush1.msra.mxu0 0.0
        %804 = vmatprep.subr.mxu0 0.0
        %805 = vmatpush1.msra.mxu0 0.0
        %806 = vmatprep.subr.mxu0 0.0
        %807 = vmatpush1.msra.mxu0 0.0
        %808 = vmatprep.mubr.f32.mxu0 0.0
        %809 = vmatmul.mubr.f32.gmra.mrb[0].mxu0 %v742
        %v810 = vpop.f32.mrb[0].mxu0
        %v811 = vadd.f32 %v739, %v810
        %v812 = vpop.f32.mrb[0].mxu0
        %813 = vdwg.mxu0
        %v814 = vld [vmem:[%s557] sm:$0x1]
        %vm815 = vcmask 64512
        %v817 = vsel %vm815, %v643, 0
        %v820 = vsel %vm815, %v727, 0
        %822 = vmatprep.subr.mxu0 0.0
        %823 = vmatpush1.xpose.msra.mxu0 %v820
        %824 = vmatprep.subr.mxu0 0.0
        %825 = vmatpush1.xpose.msra.mxu0 0.0
        %826 = vmatprep.subr.mxu0 0.0
        %827 = vmatpush1.xpose.msra.mxu0 0.0
        %828 = vmatprep.subr.mxu0 0.0
        %829 = vmatpush1.xpose.msra.mxu0 0.0
        %830 = vmatprep.subr.mxu0 0.0
        %831 = vmatpush1.xpose.msra.mxu0 0.0
        %832 = vmatprep.subr.mxu0 0.0
        %833 = vmatpush1.xpose.msra.mxu0 0.0
        %834 = vmatprep.subr.mxu0 0.0
        %835 = vmatpush1.xpose.msra.mxu0 0.0
        %836 = vmatprep.subr.mxu0 0.0
        %837 = vmatpush1.xpose.msra.mxu0 0.0
        %838 = vmatprep.subr.mxu0 0.0
        %839 = vmatpush1.xpose.msra.mxu0 0.0
        %840 = vmatprep.subr.mxu0 0.0
        %841 = vmatpush1.xpose.msra.mxu0 0.0
        %842 = vmatprep.subr.mxu0 0.0
        %843 = vmatpush1.xpose.msra.mxu0 0.0
        %844 = vmatprep.subr.mxu0 0.0
        %845 = vmatpush1.xpose.msra.mxu0 0.0
        %846 = vmatprep.subr.mxu0 0.0
        %847 = vmatpush1.xpose.msra.mxu0 0.0
        %848 = vmatprep.subr.mxu0 0.0
        %849 = vmatpush1.xpose.msra.mxu0 0.0
        %850 = vmatprep.subr.mxu0 0.0
        %851 = vmatpush1.xpose.msra.mxu0 0.0
        %852 = vmatprep.subr.mxu0 0.0
        %853 = vmatpush1.xpose.msra.mxu0 0.0
        %854 = vmatprep.subr.mxu0 0.0
        %855 = vmatpush1.xpose.msra.mxu0 0.0
        %856 = vmatprep.subr.mxu0 0.0
        %857 = vmatpush1.xpose.msra.mxu0 0.0
        %858 = vmatprep.subr.mxu0 0.0
        %859 = vmatpush1.xpose.msra.mxu0 0.0
        %860 = vmatprep.subr.mxu0 0.0
        %861 = vmatpush1.xpose.msra.mxu0 0.0
        %862 = vmatprep.subr.mxu0 0.0
        %863 = vmatpush1.xpose.msra.mxu0 0.0
        %864 = vmatprep.subr.mxu0 0.0
        %865 = vmatpush1.xpose.msra.mxu0 0.0
        %866 = vmatprep.subr.mxu0 0.0
        %867 = vmatpush1.xpose.msra.mxu0 0.0
        %868 = vmatprep.subr.mxu0 0.0
        %869 = vmatpush1.xpose.msra.mxu0 0.0
        %870 = vmatprep.subr.mxu0 0.0
        %871 = vmatpush1.xpose.msra.mxu0 0.0
        %872 = vmatprep.subr.mxu0 0.0
        %873 = vmatpush1.xpose.msra.mxu0 0.0
        %874 = vmatprep.subr.mxu0 0.0
        %875 = vmatpush1.xpose.msra.mxu0 0.0
        %876 = vmatprep.subr.mxu0 0.0
        %877 = vmatpush1.xpose.msra.mxu0 0.0
        %878 = vmatprep.subr.mxu0 0.0
        %879 = vmatpush1.xpose.msra.mxu0 0.0
        %880 = vmatprep.subr.mxu0 0.0
        %881 = vmatpush1.xpose.msra.mxu0 0.0
        %882 = vmatprep.subr.mxu0 0.0
        %883 = vmatpush1.xpose.msra.mxu0 0.0
        %884 = vmatprep.subr.mxu0 0.0
        %885 = vmatpush1.xpose.msra.mxu0 0.0
        %886 = vmatprep.mubr.f32.mxu0 0.0
        %887 = vmatmul.mubr.f32.gmra.mrb[0].mxu0 %v817
        %v888 = vpop.f32.mrb[0].mxu0
        %v889 = vadd.f32 0.0, %v888
        %v890 = vpop.f32.mrb[0].mxu0
        %891 = vdwg.mxu0
        %v892 = vmul.f32 %v889, 0.35355338
        %vm893 = vcmp.eq.f32.partialorder %v814, 0.0
        %v894 = vsel %vm893, 1, 0
        %v895 = vlaneseq
        %v896 = vshrl.u32 %v895, 7
        %v897 = vsub.s32 0, %v896
        %v898 = vrot.slane %v894, %v897
        %vm899 = vcmp.eq.s32.totalorder %v898, 1
        %v900 = vsel %vm899, -1e+09, %v892
        %v901 = vsel %vm815, %v900, -inf
        %902 = vmax.xlane.f32.xlu0 %v901
        %v903 = vpop.xlane.xlu0 %902
        %v904 = vsub.f32 %v900, %v903
        %v905 = vmul.f32 %v904, 1.442695
        %v906 = vpow.pop %v905
        %v907 = vsel %vm815, %v906, 0.0
        %908 = vadd.xlane.f32.xlu0 %v907
        %v909 = vpop.xlane.xlu0 %908
        %v910 = vrcp.pop %v909
        %v911 = vmul.f32 %v906, %v910
        %v913 = vsel %vm815, %v911, 0
        %915 = vmatprep.subr.mxu0 0.0
        %916 = vmatpush1.msra.mxu0 %v811
        %917 = vmatprep.subr.mxu0 0.0
        %918 = vmatpush1.msra.mxu0 0.0
        %919 = vmatprep.subr.mxu0 0.0
        %920 = vmatpush1.msra.mxu0 0.0
        %921 = vmatprep.subr.mxu0 0.0
        %922 = vmatpush1.msra.mxu0 0.0
        %923 = vmatprep.subr.mxu0 0.0
        %924 = vmatpush1.msra.mxu0 0.0
        %925 = vmatprep.subr.mxu0 0.0
        %926 = vmatpush1.msra.mxu0 0.0
        %927 = vmatprep.subr.mxu0 0.0
        %928 = vmatpush1.msra.mxu0 0.0
        %929 = vmatprep.subr.mxu0 0.0
        %930 = vmatpush1.msra.mxu0 0.0
        %931 = vmatprep.subr.mxu0 0.0
        %932 = vmatpush1.msra.mxu0 0.0
        %933 = vmatprep.subr.mxu0 0.0
        %934 = vmatpush1.msra.mxu0 0.0
        %935 = vmatprep.subr.mxu0 0.0
        %936 = vmatpush1.msra.mxu0 0.0
        %937 = vmatprep.subr.mxu0 0.0
        %938 = vmatpush1.msra.mxu0 0.0
        %939 = vmatprep.subr.mxu0 0.0
        %940 = vmatpush1.msra.mxu0 0.0
        %941 = vmatprep.subr.mxu0 0.0
        %942 = vmatpush1.msra.mxu0 0.0
        %943 = vmatprep.subr.mxu0 0.0
        %944 = vmatpush1.msra.mxu0 0.0
        %945 = vmatprep.subr.mxu0 0.0
        %946 = vmatpush1.msra.mxu0 0.0
        %947 = vmatprep.subr.mxu0 0.0
        %948 = vmatpush1.msra.mxu0 0.0
        %949 = vmatprep.subr.mxu0 0.0
        %950 = vmatpush1.msra.mxu0 0.0
        %951 = vmatprep.subr.mxu0 0.0
        %952 = vmatpush1.msra.mxu0 0.0
        %953 = vmatprep.subr.mxu0 0.0
        %954 = vmatpush1.msra.mxu0 0.0
        %955 = vmatprep.subr.mxu0 0.0
        %956 = vmatpush1.msra.mxu0 0.0
        %957 = vmatprep.subr.mxu0 0.0
        %958 = vmatpush1.msra.mxu0 0.0
        %959 = vmatprep.subr.mxu0 0.0
        %960 = vmatpush1.msra.mxu0 0.0
        %961 = vmatprep.subr.mxu0 0.0
        %962 = vmatpush1.msra.mxu0 0.0
        %963 = vmatprep.subr.mxu0 0.0
        %964 = vmatpush1.msra.mxu0 0.0
        %965 = vmatprep.subr.mxu0 0.0
        %966 = vmatpush1.msra.mxu0 0.0
        %967 = vmatprep.subr.mxu0 0.0
        %968 = vmatpush1.msra.mxu0 0.0
        %969 = vmatprep.subr.mxu0 0.0
        %970 = vmatpush1.msra.mxu0 0.0
        %971 = vmatprep.subr.mxu0 0.0
        %972 = vmatpush1.msra.mxu0 0.0
        %973 = vmatprep.subr.mxu0 0.0
        %974 = vmatpush1.msra.mxu0 0.0
        %975 = vmatprep.subr.mxu0 0.0
        %976 = vmatpush1.msra.mxu0 0.0
        %977 = vmatprep.subr.mxu0 0.0
        %978 = vmatpush1.msra.mxu0 0.0
        %979 = vmatprep.mubr.f32.mxu0 0.0
        %980 = vmatmul.mubr.f32.gmra.mrb[0].mxu0 %v913
        %v981 = vpop.f32.mrb[0].mxu0
        %v982 = vadd.f32 0.0, %v981
        %v983 = vpop.f32.mrb[0].mxu0
        %984 = vdwg.mxu0
        %985 = vrot.lane.b32.xlu0 %v643, 120
        %v986 = vpop.permute.xlu0 %985
        %987 = vrot.lane.b32.xlu0 %v727, 120
        %v988 = vpop.permute.xlu0 %987
        %v989 = vsel %vm815, %v986, 0
        %v991 = vsel %vm815, %v988, 0
        %993 = vmatprep.subr.mxu0 0.0
        %994 = vmatpush1.xpose.msra.mxu0 %v991
        %995 = vmatprep.subr.mxu0 0.0
        %996 = vmatpush1.xpose.msra.mxu0 0.0
        %997 = vmatprep.subr.mxu0 0.0
        %998 = vmatpush1.xpose.msra.mxu0 0.0
        %999 = vmatprep.subr.mxu0 0.0
        %1000 = vmatpush1.xpose.msra.mxu0 0.0
        %1001 = vmatprep.subr.mxu0 0.0
        %1002 = vmatpush1.xpose.msra.mxu0 0.0
        %1003 = vmatprep.subr.mxu0 0.0
        %1004 = vmatpush1.xpose.msra.mxu0 0.0
        %1005 = vmatprep.subr.mxu0 0.0
        %1006 = vmatpush1.xpose.msra.mxu0 0.0
        %1007 = vmatprep.subr.mxu0 0.0
        %1008 = vmatpush1.xpose.msra.mxu0 0.0
        %1009 = vmatprep.subr.mxu0 0.0
        %1010 = vmatpush1.xpose.msra.mxu0 0.0
        %1011 = vmatprep.subr.mxu0 0.0
        %1012 = vmatpush1.xpose.msra.mxu0 0.0
        %1013 = vmatprep.subr.mxu0 0.0
        %1014 = vmatpush1.xpose.msra.mxu0 0.0
        %1015 = vmatprep.subr.mxu0 0.0
        %1016 = vmatpush1.xpose.msra.mxu0 0.0
        %1017 = vmatprep.subr.mxu0 0.0
        %1018 = vmatpush1.xpose.msra.mxu0 0.0
        %1019 = vmatprep.subr.mxu0 0.0
        %1020 = vmatpush1.xpose.msra.mxu0 0.0
        %1021 = vmatprep.subr.mxu0 0.0
        %1022 = vmatpush1.xpose.msra.mxu0 0.0
        %1023 = vmatprep.subr.mxu0 0.0
        %1024 = vmatpush1.xpose.msra.mxu0 0.0
        %1025 = vmatprep.subr.mxu0 0.0
        %1026 = vmatpush1.xpose.msra.mxu0 0.0
        %1027 = vmatprep.subr.mxu0 0.0
        %1028 = vmatpush1.xpose.msra.mxu0 0.0
        %1029 = vmatprep.subr.mxu0 0.0
        %1030 = vmatpush1.xpose.msra.mxu0 0.0
        %1031 = vmatprep.subr.mxu0 0.0
        %1032 = vmatpush1.xpose.msra.mxu0 0.0
        %1033 = vmatprep.subr.mxu0 0.0
        %1034 = vmatpush1.xpose.msra.mxu0 0.0
        %1035 = vmatprep.subr.mxu0 0.0
        %1036 = vmatpush1.xpose.msra.mxu0 0.0
        %1037 = vmatprep.subr.mxu0 0.0
        %1038 = vmatpush1.xpose.msra.mxu0 0.0
        %1039 = vmatprep.subr.mxu0 0.0
        %1040 = vmatpush1.xpose.msra.mxu0 0.0
        %1041 = vmatprep.subr.mxu0 0.0
        %1042 = vmatpush1.xpose.msra.mxu0 0.0
        %1043 = vmatprep.subr.mxu0 0.0
        %1044 = vmatpush1.xpose.msra.mxu0 0.0
        %1045 = vmatprep.subr.mxu0 0.0
        %1046 = vmatpush1.xpose.msra.mxu0 0.0
        %1047 = vmatprep.subr.mxu0 0.0
        %1048 = vmatpush1.xpose.msra.mxu0 0.0
        %1049 = vmatprep.subr.mxu0 0.0
        %1050 = vmatpush1.xpose.msra.mxu0 0.0
        %1051 = vmatprep.subr.mxu0 0.0
        %1052 = vmatpush1.xpose.msra.mxu0 0.0
        %1053 = vmatprep.subr.mxu0 0.0
        %1054 = vmatpush1.xpose.msra.mxu0 0.0
        %1055 = vmatprep.subr.mxu0 0.0
        %1056 = vmatpush1.xpose.msra.mxu0 0.0
        %1057 = vmatprep.mubr.f32.mxu0 0.0
        %1058 = vmatmul.mubr.f32.gmra.mrb[0].mxu0 %v989
        %v1059 = vpop.f32.mrb[0].mxu0
        %v1060 = vadd.f32 0.0, %v1059
        %v1061 = vpop.f32.mrb[0].mxu0
        %1062 = vdwg.mxu0
        %v1063 = vmul.f32 %v1060, 0.35355338
        %v1064 = vsel %vm899, -1e+09, %v1063
        %v1065 = vsel %vm815, %v1064, -inf
        %1066 = vmax.xlane.f32.xlu0 %v1065
        %v1067 = vpop.xlane.xlu0 %1066
        %v1068 = vsub.f32 %v1064, %v1067
        %v1069 = vmul.f32 %v1068, 1.442695
        %v1070 = vpow.pop %v1069
        %v1071 = vsel %vm815, %v1070, 0.0
        %1072 = vadd.xlane.f32.xlu0 %v1071
        %v1073 = vpop.xlane.xlu0 %1072
        %v1074 = vrcp.pop %v1073
        %v1075 = vmul.f32 %v1070, %v1074
        %1077 = vrot.lane.b32.xlu0 %v811, 120
        %v1078 = vpop.permute.xlu0 %1077
        %v1081 = vsel %vm815, %v1075, 0
        %1083 = vmatprep.subr.mxu0 0.0
        %1084 = vmatpush1.msra.mxu0 %v1078
        %1085 = vmatprep.subr.mxu0 0.0
        %1086 = vmatpush1.msra.mxu0 0.0
        %1087 = vmatprep.subr.mxu0 0.0
        %1088 = vmatpush1.msra.mxu0 0.0
        %1089 = vmatprep.subr.mxu0 0.0
        %1090 = vmatpush1.msra.mxu0 0.0
        %1091 = vmatprep.subr.mxu0 0.0
        %1092 = vmatpush1.msra.mxu0 0.0
        %1093 = vmatprep.subr.mxu0 0.0
        %1094 = vmatpush1.msra.mxu0 0.0
        %1095 = vmatprep.subr.mxu0 0.0
        %1096 = vmatpush1.msra.mxu0 0.0
        %1097 = vmatprep.subr.mxu0 0.0
        %1098 = vmatpush1.msra.mxu0 0.0
        %1099 = vmatprep.subr.mxu0 0.0
        %1100 = vmatpush1.msra.mxu0 0.0
        %1101 = vmatprep.subr.mxu0 0.0
        %1102 = vmatpush1.msra.mxu0 0.0
        %1103 = vmatprep.subr.mxu0 0.0
        %1104 = vmatpush1.msra.mxu0 0.0
        %1105 = vmatprep.subr.mxu0 0.0
        %1106 = vmatpush1.msra.mxu0 0.0
        %1107 = vmatprep.subr.mxu0 0.0
        %1108 = vmatpush1.msra.mxu0 0.0
        %1109 = vmatprep.subr.mxu0 0.0
        %1110 = vmatpush1.msra.mxu0 0.0
        %1111 = vmatprep.subr.mxu0 0.0
        %1112 = vmatpush1.msra.mxu0 0.0
        %1113 = vmatprep.subr.mxu0 0.0
        %1114 = vmatpush1.msra.mxu0 0.0
        %1115 = vmatprep.subr.mxu0 0.0
        %1116 = vmatpush1.msra.mxu0 0.0
        %1117 = vmatprep.subr.mxu0 0.0
        %1118 = vmatpush1.msra.mxu0 0.0
        %1119 = vmatprep.subr.mxu0 0.0
        %1120 = vmatpush1.msra.mxu0 0.0
        %1121 = vmatprep.subr.mxu0 0.0
        %1122 = vmatpush1.msra.mxu0 0.0
        %1123 = vmatprep.subr.mxu0 0.0
        %1124 = vmatpush1.msra.mxu0 0.0
        %1125 = vmatprep.subr.mxu0 0.0
        %1126 = vmatpush1.msra.mxu0 0.0
        %1127 = vmatprep.subr.mxu0 0.0
        %1128 = vmatpush1.msra.mxu0 0.0
        %1129 = vmatprep.subr.mxu0 0.0
        %1130 = vmatpush1.msra.mxu0 0.0
        %1131 = vmatprep.subr.mxu0 0.0
        %1132 = vmatpush1.msra.mxu0 0.0
        %1133 = vmatprep.subr.mxu0 0.0
        %1134 = vmatpush1.msra.mxu0 0.0
        %1135 = vmatprep.subr.mxu0 0.0
        %1136 = vmatpush1.msra.mxu0 0.0
        %1137 = vmatprep.subr.mxu0 0.0
        %1138 = vmatpush1.msra.mxu0 0.0
        %1139 = vmatprep.subr.mxu0 0.0
        %1140 = vmatpush1.msra.mxu0 0.0
        %1141 = vmatprep.subr.mxu0 0.0
        %1142 = vmatpush1.msra.mxu0 0.0
        %1143 = vmatprep.subr.mxu0 0.0
        %1144 = vmatpush1.msra.mxu0 0.0
        %1145 = vmatprep.subr.mxu0 0.0
        %1146 = vmatpush1.msra.mxu0 0.0
        %1147 = vmatprep.mubr.f32.mxu0 0.0
        %1148 = vmatmul.mubr.f32.gmra.mrb[0].mxu0 %v1081
        %v1149 = vpop.f32.mrb[0].mxu0
        %v1150 = vadd.f32 0.0, %v1149
        %v1151 = vpop.f32.mrb[0].mxu0
        %1152 = vdwg.mxu0
        %1153 = vrot.lane.b32.xlu0 %v643, 112
        %v1154 = vpop.permute.xlu0 %1153
        %1155 = vrot.lane.b32.xlu0 %v727, 112
        %v1156 = vpop.permute.xlu0 %1155
        %v1157 = vsel %vm815, %v1154, 0
        %v1159 = vsel %vm815, %v1156, 0
        %1161 = vmatprep.subr.mxu0 0.0
        %1162 = vmatpush1.xpose.msra.mxu0 %v1159
        %1163 = vmatprep.subr.mxu0 0.0
        %1164 = vmatpush1.xpose.msra.mxu0 0.0
        %1165 = vmatprep.subr.mxu0 0.0
        %1166 = vmatpush1.xpose.msra.mxu0 0.0
        %1167 = vmatprep.subr.mxu0 0.0
        %1168 = vmatpush1.xpose.msra.mxu0 0.0
        %1169 = vmatprep.subr.mxu0 0.0
        %1170 = vmatpush1.xpose.msra.mxu0 0.0
        %1171 = vmatprep.subr.mxu0 0.0
        %1172 = vmatpush1.xpose.msra.mxu0 0.0
        %1173 = vmatprep.subr.mxu0 0.0
        %1174 = vmatpush1.xpose.msra.mxu0 0.0
        %1175 = vmatprep.subr.mxu0 0.0
        %1176 = vmatpush1.xpose.msra.mxu0 0.0
        %1177 = vmatprep.subr.mxu0 0.0
        %1178 = vmatpush1.xpose.msra.mxu0 0.0
        %1179 = vmatprep.subr.mxu0 0.0
        %1180 = vmatpush1.xpose.msra.mxu0 0.0
        %1181 = vmatprep.subr.mxu0 0.0
        %1182 = vmatpush1.xpose.msra.mxu0 0.0
        %1183 = vmatprep.subr.mxu0 0.0
        %1184 = vmatpush1.xpose.msra.mxu0 0.0
        %1185 = vmatprep.subr.mxu0 0.0
        %1186 = vmatpush1.xpose.msra.mxu0 0.0
        %1187 = vmatprep.subr.mxu0 0.0
        %1188 = vmatpush1.xpose.msra.mxu0 0.0
        %1189 = vmatprep.subr.mxu0 0.0
        %1190 = vmatpush1.xpose.msra.mxu0 0.0
        %1191 = vmatprep.subr.mxu0 0.0
        %1192 = vmatpush1.xpose.msra.mxu0 0.0
        %1193 = vmatprep.subr.mxu0 0.0
        %1194 = vmatpush1.xpose.msra.mxu0 0.0
        %1195 = vmatprep.subr.mxu0 0.0
        %1196 = vmatpush1.xpose.msra.mxu0 0.0
        %1197 = vmatprep.subr.mxu0 0.0
        %1198 = vmatpush1.xpose.msra.mxu0 0.0
        %1199 = vmatprep.subr.mxu0 0.0
        %1200 = vmatpush1.xpose.msra.mxu0 0.0
        %1201 = vmatprep.subr.mxu0 0.0
        %1202 = vmatpush1.xpose.msra.mxu0 0.0
        %1203 = vmatprep.subr.mxu0 0.0
        %1204 = vmatpush1.xpose.msra.mxu0 0.0
        %1205 = vmatprep.subr.mxu0 0.0
        %1206 = vmatpush1.xpose.msra.mxu0 0.0
        %1207 = vmatprep.subr.mxu0 0.0
        %1208 = vmatpush1.xpose.msra.mxu0 0.0
        %1209 = vmatprep.subr.mxu0 0.0
        %1210 = vmatpush1.xpose.msra.mxu0 0.0
        %1211 = vmatprep.subr.mxu0 0.0
        %1212 = vmatpush1.xpose.msra.mxu0 0.0
        %1213 = vmatprep.subr.mxu0 0.0
        %1214 = vmatpush1.xpose.msra.mxu0 0.0
        %1215 = vmatprep.subr.mxu0 0.0
        %1216 = vmatpush1.xpose.msra.mxu0 0.0
        %1217 = vmatprep.subr.mxu0 0.0
        %1218 = vmatpush1.xpose.msra.mxu0 0.0
        %1219 = vmatprep.subr.mxu0 0.0
        %1220 = vmatpush1.xpose.msra.mxu0 0.0
        %1221 = vmatprep.subr.mxu0 0.0
        %1222 = vmatpush1.xpose.msra.mxu0 0.0
        %1223 = vmatprep.subr.mxu0 0.0
        %1224 = vmatpush1.xpose.msra.mxu0 0.0
        %1225 = vmatprep.mubr.f32.mxu0 0.0
        %1226 = vmatmul.mubr.f32.gmra.mrb[0].mxu0 %v1157
        %v1227 = vpop.f32.mrb[0].mxu0
        %v1228 = vadd.f32 0.0, %v1227
        %v1229 = vpop.f32.mrb[0].mxu0
        %1230 = vdwg.mxu0
        %v1231 = vmul.f32 %v1228, 0.35355338
        %v1232 = vsel %vm899, -1e+09, %v1231
        %v1233 = vsel %vm815, %v1232, -inf
        %1234 = vmax.xlane.f32.xlu0 %v1233
        %v1235 = vpop.xlane.xlu0 %1234
        %v1236 = vsub.f32 %v1232, %v1235
        %v1237 = vmul.f32 %v1236, 1.442695
        %v1238 = vpow.pop %v1237
        %v1239 = vsel %vm815, %v1238, 0.0
        %1240 = vadd.xlane.f32.xlu0 %v1239
        %v1241 = vpop.xlane.xlu0 %1240
        %v1242 = vrcp.pop %v1241
        %v1243 = vmul.f32 %v1238, %v1242
        %1244 = vrot.lane.b32.xlu0 %v811, 112
        %v1245 = vpop.permute.xlu0 %1244
        %v1248 = vsel %vm815, %v1243, 0
        %1250 = vmatprep.subr.mxu0 0.0
        %1251 = vmatpush1.msra.mxu0 %v1245
        %1252 = vmatprep.subr.mxu0 0.0
        %1253 = vmatpush1.msra.mxu0 0.0
        %1254 = vmatprep.subr.mxu0 0.0
        %1255 = vmatpush1.msra.mxu0 0.0
        %1256 = vmatprep.subr.mxu0 0.0
        %1257 = vmatpush1.msra.mxu0 0.0
        %1258 = vmatprep.subr.mxu0 0.0
        %1259 = vmatpush1.msra.mxu0 0.0
        %1260 = vmatprep.subr.mxu0 0.0
        %1261 = vmatpush1.msra.mxu0 0.0
        %1262 = vmatprep.subr.mxu0 0.0
        %1263 = vmatpush1.msra.mxu0 0.0
        %1264 = vmatprep.subr.mxu0 0.0
        %1265 = vmatpush1.msra.mxu0 0.0
        %1266 = vmatprep.subr.mxu0 0.0
        %1267 = vmatpush1.msra.mxu0 0.0
        %1268 = vmatprep.subr.mxu0 0.0
        %1269 = vmatpush1.msra.mxu0 0.0
        %1270 = vmatprep.subr.mxu0 0.0
        %1271 = vmatpush1.msra.mxu0 0.0
        %1272 = vmatprep.subr.mxu0 0.0
        %1273 = vmatpush1.msra.mxu0 0.0
        %1274 = vmatprep.subr.mxu0 0.0
        %1275 = vmatpush1.msra.mxu0 0.0
        %1276 = vmatprep.subr.mxu0 0.0
        %1277 = vmatpush1.msra.mxu0 0.0
        %1278 = vmatprep.subr.mxu0 0.0
        %1279 = vmatpush1.msra.mxu0 0.0
        %1280 = vmatprep.subr.mxu0 0.0
        %1281 = vmatpush1.msra.mxu0 0.0
        %1282 = vmatprep.subr.mxu0 0.0
        %1283 = vmatpush1.msra.mxu0 0.0
        %1284 = vmatprep.subr.mxu0 0.0
        %1285 = vmatpush1.msra.mxu0 0.0
        %1286 = vmatprep.subr.mxu0 0.0
        %1287 = vmatpush1.msra.mxu0 0.0
        %1288 = vmatprep.subr.mxu0 0.0
        %1289 = vmatpush1.msra.mxu0 0.0
        %1290 = vmatprep.subr.mxu0 0.0
        %1291 = vmatpush1.msra.mxu0 0.0
        %1292 = vmatprep.subr.mxu0 0.0
        %1293 = vmatpush1.msra.mxu0 0.0
        %1294 = vmatprep.subr.mxu0 0.0
        %1295 = vmatpush1.msra.mxu0 0.0
        %1296 = vmatprep.subr.mxu0 0.0
        %1297 = vmatpush1.msra.mxu0 0.0
        %1298 = vmatprep.subr.mxu0 0.0
        %1299 = vmatpush1.msra.mxu0 0.0
        %1300 = vmatprep.subr.mxu0 0.0
        %1301 = vmatpush1.msra.mxu0 0.0
        %1302 = vmatprep.subr.mxu0 0.0
        %1303 = vmatpush1.msra.mxu0 0.0
        %1304 = vmatprep.subr.mxu0 0.0
        %1305 = vmatpush1.msra.mxu0 0.0
        %1306 = vmatprep.subr.mxu0 0.0
        %1307 = vmatpush1.msra.mxu0 0.0
        %1308 = vmatprep.subr.mxu0 0.0
        %1309 = vmatpush1.msra.mxu0 0.0
        %1310 = vmatprep.subr.mxu0 0.0
        %1311 = vmatpush1.msra.mxu0 0.0
        %1312 = vmatprep.subr.mxu0 0.0
        %1313 = vmatpush1.msra.mxu0 0.0
        %1314 = vmatprep.mubr.f32.mxu0 0.0
        %1315 = vmatmul.mubr.f32.gmra.mrb[0].mxu0 %v1248
        %v1316 = vpop.f32.mrb[0].mxu0
        %v1317 = vadd.f32 0.0, %v1316
        %v1318 = vpop.f32.mrb[0].mxu0
        %1319 = vdwg.mxu0
        %1320 = vrot.lane.b32.xlu0 %v643, 104
        %v1321 = vpop.permute.xlu0 %1320
        %1322 = vrot.lane.b32.xlu0 %v727, 104
        %v1323 = vpop.permute.xlu0 %1322
        %v1324 = vsel %vm815, %v1321, 0
        %v1326 = vsel %vm815, %v1323, 0
        %1328 = vmatprep.subr.mxu0 0.0
        %1329 = vmatpush1.xpose.msra.mxu0 %v1326
        %1330 = vmatprep.subr.mxu0 0.0
        %1331 = vmatpush1.xpose.msra.mxu0 0.0
        %1332 = vmatprep.subr.mxu0 0.0
        %1333 = vmatpush1.xpose.msra.mxu0 0.0
        %1334 = vmatprep.subr.mxu0 0.0
        %1335 = vmatpush1.xpose.msra.mxu0 0.0
        %1336 = vmatprep.subr.mxu0 0.0
        %1337 = vmatpush1.xpose.msra.mxu0 0.0
        %1338 = vmatprep.subr.mxu0 0.0
        %1339 = vmatpush1.xpose.msra.mxu0 0.0
        %1340 = vmatprep.subr.mxu0 0.0
        %1341 = vmatpush1.xpose.msra.mxu0 0.0
        %1342 = vmatprep.subr.mxu0 0.0
        %1343 = vmatpush1.xpose.msra.mxu0 0.0
        %1344 = vmatprep.subr.mxu0 0.0
        %1345 = vmatpush1.xpose.msra.mxu0 0.0
        %1346 = vmatprep.subr.mxu0 0.0
        %1347 = vmatpush1.xpose.msra.mxu0 0.0
        %1348 = vmatprep.subr.mxu0 0.0
        %1349 = vmatpush1.xpose.msra.mxu0 0.0
        %1350 = vmatprep.subr.mxu0 0.0
        %1351 = vmatpush1.xpose.msra.mxu0 0.0
        %1352 = vmatprep.subr.mxu0 0.0
        %1353 = vmatpush1.xpose.msra.mxu0 0.0
        %1354 = vmatprep.subr.mxu0 0.0
        %1355 = vmatpush1.xpose.msra.mxu0 0.0
        %1356 = vmatprep.subr.mxu0 0.0
        %1357 = vmatpush1.xpose.msra.mxu0 0.0
        %1358 = vmatprep.subr.mxu0 0.0
        %1359 = vmatpush1.xpose.msra.mxu0 0.0
        %1360 = vmatprep.subr.mxu0 0.0
        %1361 = vmatpush1.xpose.msra.mxu0 0.0
        %1362 = vmatprep.subr.mxu0 0.0
        %1363 = vmatpush1.xpose.msra.mxu0 0.0
        %1364 = vmatprep.subr.mxu0 0.0
        %1365 = vmatpush1.xpose.msra.mxu0 0.0
        %1366 = vmatprep.subr.mxu0 0.0
        %1367 = vmatpush1.xpose.msra.mxu0 0.0
        %1368 = vmatprep.subr.mxu0 0.0
        %1369 = vmatpush1.xpose.msra.mxu0 0.0
        %1370 = vmatprep.subr.mxu0 0.0
        %1371 = vmatpush1.xpose.msra.mxu0 0.0
        %1372 = vmatprep.subr.mxu0 0.0
        %1373 = vmatpush1.xpose.msra.mxu0 0.0
        %1374 = vmatprep.subr.mxu0 0.0
        %1375 = vmatpush1.xpose.msra.mxu0 0.0
        %1376 = vmatprep.subr.mxu0 0.0
        %1377 = vmatpush1.xpose.msra.mxu0 0.0
        %1378 = vmatprep.subr.mxu0 0.0
        %1379 = vmatpush1.xpose.msra.mxu0 0.0
        %1380 = vmatprep.subr.mxu0 0.0
        %1381 = vmatpush1.xpose.msra.mxu0 0.0
        %1382 = vmatprep.subr.mxu0 0.0
        %1383 = vmatpush1.xpose.msra.mxu0 0.0
        %1384 = vmatprep.subr.mxu0 0.0
        %1385 = vmatpush1.xpose.msra.mxu0 0.0
        %1386 = vmatprep.subr.mxu0 0.0
        %1387 = vmatpush1.xpose.msra.mxu0 0.0
        %1388 = vmatprep.subr.mxu0 0.0
        %1389 = vmatpush1.xpose.msra.mxu0 0.0
        %1390 = vmatprep.subr.mxu0 0.0
        %1391 = vmatpush1.xpose.msra.mxu0 0.0
        %1392 = vmatprep.mubr.f32.mxu0 0.0
        %1393 = vmatmul.mubr.f32.gmra.mrb[0].mxu0 %v1324
        %v1394 = vpop.f32.mrb[0].mxu0
        %v1395 = vadd.f32 0.0, %v1394
        %v1396 = vpop.f32.mrb[0].mxu0
        %1397 = vdwg.mxu0
        %v1398 = vmul.f32 %v1395, 0.35355338
        %v1399 = vsel %vm899, -1e+09, %v1398
        %v1400 = vsel %vm815, %v1399, -inf
        %1401 = vmax.xlane.f32.xlu0 %v1400
        %v1402 = vpop.xlane.xlu0 %1401
        %v1403 = vsub.f32 %v1399, %v1402
        %v1404 = vmul.f32 %v1403, 1.442695
        %v1405 = vpow.pop %v1404
        %v1406 = vsel %vm815, %v1405, 0.0
        %1407 = vadd.xlane.f32.xlu0 %v1406
        %v1408 = vpop.xlane.xlu0 %1407
        %v1409 = vrcp.pop %v1408
        %v1410 = vmul.f32 %v1405, %v1409
        %1411 = vrot.lane.b32.xlu0 %v811, 104
        %v1412 = vpop.permute.xlu0 %1411
        %v1415 = vsel %vm815, %v1410, 0
        %1417 = vmatprep.subr.mxu0 0.0
        %1418 = vmatpush1.msra.mxu0 %v1412
        %1419 = vmatprep.subr.mxu0 0.0
        %1420 = vmatpush1.msra.mxu0 0.0
        %1421 = vmatprep.subr.mxu0 0.0
        %1422 = vmatpush1.msra.mxu0 0.0
        %1423 = vmatprep.subr.mxu0 0.0
        %1424 = vmatpush1.msra.mxu0 0.0
        %1425 = vmatprep.subr.mxu0 0.0
        %1426 = vmatpush1.msra.mxu0 0.0
        %1427 = vmatprep.subr.mxu0 0.0
        %1428 = vmatpush1.msra.mxu0 0.0
        %1429 = vmatprep.subr.mxu0 0.0
        %1430 = vmatpush1.msra.mxu0 0.0
        %1431 = vmatprep.subr.mxu0 0.0
        %1432 = vmatpush1.msra.mxu0 0.0
        %1433 = vmatprep.subr.mxu0 0.0
        %1434 = vmatpush1.msra.mxu0 0.0
        %1435 = vmatprep.subr.mxu0 0.0
        %1436 = vmatpush1.msra.mxu0 0.0
        %1437 = vmatprep.subr.mxu0 0.0
        %1438 = vmatpush1.msra.mxu0 0.0
        %1439 = vmatprep.subr.mxu0 0.0
        %1440 = vmatpush1.msra.mxu0 0.0
        %1441 = vmatprep.subr.mxu0 0.0
        %1442 = vmatpush1.msra.mxu0 0.0
        %1443 = vmatprep.subr.mxu0 0.0
        %1444 = vmatpush1.msra.mxu0 0.0
        %1445 = vmatprep.subr.mxu0 0.0
        %1446 = vmatpush1.msra.mxu0 0.0
        %1447 = vmatprep.subr.mxu0 0.0
        %1448 = vmatpush1.msra.mxu0 0.0
        %1449 = vmatprep.subr.mxu0 0.0
        %1450 = vmatpush1.msra.mxu0 0.0
        %1451 = vmatprep.subr.mxu0 0.0
        %1452 = vmatpush1.msra.mxu0 0.0
        %1453 = vmatprep.subr.mxu0 0.0
        %1454 = vmatpush1.msra.mxu0 0.0
        %1455 = vmatprep.subr.mxu0 0.0
        %1456 = vmatpush1.msra.mxu0 0.0
        %1457 = vmatprep.subr.mxu0 0.0
        %1458 = vmatpush1.msra.mxu0 0.0
        %1459 = vmatprep.subr.mxu0 0.0
        %1460 = vmatpush1.msra.mxu0 0.0
        %1461 = vmatprep.subr.mxu0 0.0
        %1462 = vmatpush1.msra.mxu0 0.0
        %1463 = vmatprep.subr.mxu0 0.0
        %1464 = vmatpush1.msra.mxu0 0.0
        %1465 = vmatprep.subr.mxu0 0.0
        %1466 = vmatpush1.msra.mxu0 0.0
        %1467 = vmatprep.subr.mxu0 0.0
        %1468 = vmatpush1.msra.mxu0 0.0
        %1469 = vmatprep.subr.mxu0 0.0
        %1470 = vmatpush1.msra.mxu0 0.0
        %1471 = vmatprep.subr.mxu0 0.0
        %1472 = vmatpush1.msra.mxu0 0.0
        %1473 = vmatprep.subr.mxu0 0.0
        %1474 = vmatpush1.msra.mxu0 0.0
        %1475 = vmatprep.subr.mxu0 0.0
        %1476 = vmatpush1.msra.mxu0 0.0
        %1477 = vmatprep.subr.mxu0 0.0
        %1478 = vmatpush1.msra.mxu0 0.0
        %1479 = vmatprep.subr.mxu0 0.0
        %1480 = vmatpush1.msra.mxu0 0.0
        %1481 = vmatprep.mubr.f32.mxu0 0.0
        %1482 = vmatmul.mubr.f32.gmra.mrb[0].mxu0 %v1415
        %v1483 = vpop.f32.mrb[0].mxu0
        %v1484 = vadd.f32 0.0, %v1483
        %v1485 = vpop.f32.mrb[0].mxu0
        %1486 = vdwg.mxu0
        %1488 = vrot.lane.b32.xlu0 %v1150, 8
        %v1489 = vpop.permute.xlu0 %1488
        %1492 = vrot.lane.b32.xlu0 %v1317, 16
        %v1493 = vpop.permute.xlu0 %1492
        %1496 = vrot.lane.b32.xlu0 %v1484, 24
        %v1497 = vpop.permute.xlu0 %1496
        %v1499 = vsel %vm815, %v982, %v1489
        %vm1500 = vcmask 130048
        %v1501 = vsel %vm1500, %v1499, %v1493
        %vm1502 = vcmask 195584
        %v1503 = vsel %vm1502, %v1501, %v1497
        %v1504 = vld [vmem:[%s10] sm:$0xff]
        %v1505 = vld [vmem:[%s10 + $0x8] sm:$0xff]
        %v1506 = vld [vmem:[%s10 + $0x10] sm:$0xff]
        %v1507 = vld [vmem:[%s10 + $0x18] sm:$0xff]
        %v1508 = vld [vmem:[%s11] sm:$0x1]
        %v1510 = vlaneseq
        %v1511 = vshrl.u32 %v1510, 7
        %v1512 = vsub.s32 0, %v1511
        %v1513 = vrot.slane %v1508, %v1512
        %v1516 = vsel %vm572, %v1503, 0
        %1518 = vmatprep.subr.mxu0 0.0
        %1519 = vmatpush1.msra.mxu0 %v1504
        %1520 = vmatprep.subr.mxu0 0.0
        %1521 = vmatpush1.msra.mxu0 %v1505
        %1522 = vmatprep.subr.mxu0 0.0
        %1523 = vmatpush1.msra.mxu0 %v1506
        %1524 = vmatprep.subr.mxu0 0.0
        %1525 = vmatpush1.msra.mxu0 %v1507
        %1526 = vmatprep.subr.mxu0 0.0
        %1527 = vmatpush1.msra.mxu0 0.0
        %1528 = vmatprep.subr.mxu0 0.0
        %1529 = vmatpush1.msra.mxu0 0.0
        %1530 = vmatprep.subr.mxu0 0.0
        %1531 = vmatpush1.msra.mxu0 0.0
        %1532 = vmatprep.subr.mxu0 0.0
        %1533 = vmatpush1.msra.mxu0 0.0
        %1534 = vmatprep.subr.mxu0 0.0
        %1535 = vmatpush1.msra.mxu0 0.0
        %1536 = vmatprep.subr.mxu0 0.0
        %1537 = vmatpush1.msra.mxu0 0.0
        %1538 = vmatprep.subr.mxu0 0.0
        %1539 = vmatpush1.msra.mxu0 0.0
        %1540 = vmatprep.subr.mxu0 0.0
        %1541 = vmatpush1.msra.mxu0 0.0
        %1542 = vmatprep.subr.mxu0 0.0
        %1543 = vmatpush1.msra.mxu0 0.0
        %1544 = vmatprep.subr.mxu0 0.0
        %1545 = vmatpush1.msra.mxu0 0.0
        %1546 = vmatprep.subr.mxu0 0.0
        %1547 = vmatpush1.msra.mxu0 0.0
        %1548 = vmatprep.subr.mxu0 0.0
        %1549 = vmatpush1.msra.mxu0 0.0
        %1550 = vmatprep.subr.mxu0 0.0
        %1551 = vmatpush1.msra.mxu0 0.0
        %1552 = vmatprep.subr.mxu0 0.0
        %1553 = vmatpush1.msra.mxu0 0.0
        %1554 = vmatprep.subr.mxu0 0.0
        %1555 = vmatpush1.msra.mxu0 0.0
        %1556 = vmatprep.subr.mxu0 0.0
        %1557 = vmatpush1.msra.mxu0 0.0
        %1558 = vmatprep.subr.mxu0 0.0
        %1559 = vmatpush1.msra.mxu0 0.0
        %1560 = vmatprep.subr.mxu0 0.0
        %1561 = vmatpush1.msra.mxu0 0.0
        %1562 = vmatprep.subr.mxu0 0.0
        %1563 = vmatpush1.msra.mxu0 0.0
        %1564 = vmatprep.subr.mxu0 0.0
        %1565 = vmatpush1.msra.mxu0 0.0
        %1566 = vmatprep.subr.mxu0 0.0
        %1567 = vmatpush1.msra.mxu0 0.0
        %1568 = vmatprep.subr.mxu0 0.0
        %1569 = vmatpush1.msra.mxu0 0.0
        %1570 = vmatprep.subr.mxu0 0.0
        %1571 = vmatpush1.msra.mxu0 0.0
        %1572 = vmatprep.subr.mxu0 0.0
        %1573 = vmatpush1.msra.mxu0 0.0
        %1574 = vmatprep.subr.mxu0 0.0
        %1575 = vmatpush1.msra.mxu0 0.0
        %1576 = vmatprep.subr.mxu0 0.0
        %1577 = vmatpush1.msra.mxu0 0.0
        %1578 = vmatprep.subr.mxu0 0.0
        %1579 = vmatpush1.msra.mxu0 0.0
        %1580 = vmatprep.subr.mxu0 0.0
        %1581 = vmatpush1.msra.mxu0 0.0
        %1582 = vmatprep.mubr.f32.mxu0 0.0
        %1583 = vmatmul.mubr.f32.gmra.mrb[0].mxu0 %v1516
        %v1584 = vpop.f32.mrb[0].mxu0
        %v1585 = vadd.f32 %v1513, %v1584
        %v1586 = vpop.f32.mrb[0].mxu0
        %1587 = vdwg.mxu0
        %1588 = vst.msk [vmem:[%s554] sm:$0xff] %vm572, %v1585
        %s1589 = sand.u32 %s314, 1
        %s1590 = scalar_lea.sflag [#allocation4], %s1589
        %s1591 = sand.u32 %s314, 1
        %s1592 = smul.addr %s1591, 8
        %s1593 = scalar_lea.vmem [#allocation13], %s1592
        // Predicated region
        $region93: #{tpu_custom_call.1} parent=67 // pred_check
          %p1594 = pneg %p324
        $region94: #{tpu_custom_call.1} parent=67 // pred_check_branch
          %1596 = sbr.rel (%p1594) target = $region96
        $region95: #{tpu_custom_call.1} parent=67 // pred_region
          %s1598 = ssub.s32 128, 128
          %1599 = vsyncadd %s1590, %s1598
          %s1600 = smul.addr %s34, 128
          %s1601 = scalar_lea.hbm %s12, %s1600
          %s1603 = sshll.u32 %s1593, 4
          %s1604 = int_to_ptr.vmem [resolvable:$true] %s1603
          %1606 = dma.vmem_to_hbm [thread:$0]  %s1604, 128, %s1601, %s1590
        $region96: #{tpu_custom_call.1} parent=67 // pred_fallthru
          _
      $region68: #{tpu_custom_call.1} parent=5 // pred_fallthru
        _
      %p1607 = scmp.le.s32.totalorder 2, %s29
      // Predicated region
      $region97: #{tpu_custom_call.1} parent=5 // pred_check
        %p1608 = pneg %p1607
      $region98: #{tpu_custom_call.1} parent=5 // pred_check_branch
        %1610 = sbr.rel (%p1608) target = $region100
      $region99: #{tpu_custom_call.1} parent=5 // pred_region
        %s1611 = ssub.s32 %s29, 2
        // Predicated region
        $region101: #{tpu_custom_call.1} parent=99 // pred_check
          %p1612 = pneg %p330
        $region102: #{tpu_custom_call.1} parent=99 // pred_check_branch
          %1614 = sbr.rel (%p1612) target = $region104
        $region103: #{tpu_custom_call.1} parent=99 // pred_region
          %s1615 = sand.u32 %s315, 1
          %s1616 = scalar_lea.sflag [#allocation4], %s1615
          %s1617 = sand.u32 %s315, 1
          %s1618 = smul.addr %s1617, 8
          %s1619 = scalar_lea.vmem [#allocation13], %s1618
          %1620 = dma.done %s1616, 128
        $region104: #{tpu_custom_call.1} parent=99 // pred_fallthru
          _
      $region100: #{tpu_custom_call.1} parent=5 // pred_fallthru
        _
    $region6: #{tpu_custom_call.1} parent=1 // loop_footer
      %s33 = sadd.s32 1, %s29
    $region7: #{tpu_custom_call.1} parent=1 // loop_footer_branch
      %28 = sbr.rel target = $region3
    $region8: #{tpu_custom_call.1} parent=1 // loop_exit
      _
    %1621 = vsyncpa [#allocation3], 1
    %s1622 = scalar_lea.sflag [#allocation3], 1
    %1623 = vsyncpa %s1622, 1
    %1624 = vsyncpa [#allocation6], 1
    %s1625 = scalar_lea.sflag [#allocation6], 1
    %1626 = vsyncpa %s1625, 1
    %1627 = vsyncpa [#allocation9], 1
    %1628 = vsyncpa [#allocation12], 1
    %1629 = vsyncpa [#allocation4], 1
    %s1630 = scalar_lea.sflag [#allocation4], 1
    %1631 = vsyncpa %s1630, 1

</llo_original>
